<compile_context>
chip_gen: v7x
topology: tpu7x:2x2x1
jax: 0.10.0
libtpu: 0.0.40
codegen_flags: <defaults>
</compile_context>

<pallas_src>
import functools
import math

import numpy as np
import jax
import jax.numpy as jnp
from jax.experimental import pallas as pl
from jax.experimental.pallas import tpu as pltpu


def same_padding(kernel_size, stride=1):
    # dtk convention: padding such that the transposed conv upsamples exactly
    # by `stride`.
    return max(kernel_size - stride, 0)


def _phase_geometry(K, s, p):
    """Sub-pixel decomposition of ConvTranspose2d(K, stride=s, padding=p).

    Output pixel oh = qh*s + r receives x[qh + d_r - j] * W[e_r + s*j]; taps
    are re-indexed onto a union window of size U so every phase reads the same
    (shifted) input rows.  Returns (T, U, pad_lo, pad_hi, Sel) with
    Sel[r, u, k] = 1 iff phase r pairs union offset u with kernel index k.
    """
    T = -(-K // s)                           # taps per phase (ceil(K/s))
    d = [(r + p) // s for r in range(s)]
    e = [(r + p) % s for r in range(s)]
    d_min, d_max = min(d), max(d)
    U = T + (d_max - d_min)                  # union tap-window size
    pad_lo = (T - 1) - d_min                 # top/left zero pad of the input
    pad_hi = d_max                           # bottom/right zero pad
    assert pad_lo >= 0 and pad_hi >= 0
    Sel = np.zeros((s, U, K), np.float32)
    for r in range(s):
        base = d[r] - d_min
        for t in range(T):
            k = e[r] + s * (T - 1 - t)
            if 0 <= k < K:
                Sel[r, base + t, k] = 1.0
    return T, U, pad_lo, pad_hi, Sel


def _cin_pad(cin, compute_dtype):
    """Pad Cin to a full sublane group: 8 rows for f32, 16 for bf16."""
    spg = (8 * 4) // jnp.dtype(compute_dtype).itemsize
    return -(-cin // spg) * spg


def precompute_phase_weights(weight, *, kernel_size, stride, cin_pad,
                             compute_dtype):
    """One-time transform of the ConvTranspose2d weight (Cin, Cout, K, K) into
    per-tap phase weights of shape (U*U, s*s*Cout, cin_pad).

    This is a parameter transform: do it once at module init (it is hoisted
    out of the per-call forward path on purpose).
    """
    Cin, Cout, K, K2 = weight.shape
    assert K == K2 == kernel_size
    s = stride
    p = same_padding(K, s) // 2
    _, U, _, _, Sel = _phase_geometry(K, s, p)
    sel = jnp.asarray(Sel, weight.dtype)
    # wph[rh, rw, co, hh, ww, ci] = sum_{k,l} Sel[rh,hh,k] Sel[rw,ww,l] W[ci,co,k,l]
    wph = jnp.einsum('ahk,bwl,iokl->abohwi', sel, sel, weight)
    # -> (hh, ww, rh, rw, co, ci) -> (U*U, s*s*Cout, Cin), zero-pad Cin.
    wt = jnp.transpose(wph, (3, 4, 0, 1, 2, 5)).reshape(U * U, s * s * Cout, Cin)
    if cin_pad > Cin:
        wt = jnp.pad(wt, ((0, 0), (0, 0), (0, cin_pad - Cin)))
    return wt.astype(compute_dtype)


def _deconv_phase_kernel(x_ref, w_ref, o_ref, *, U, Wp, cols):
    """One (batch, row-block) grid step: all s*s output phases of the block.

    x_ref : (1, 1, cin_p, (hb+U)*Wp) haloed, channel/lane-padded input block
            (plain BlockSpec -> auto double-buffered by the Pallas pipeline).
    w_ref : (U*U, s*s*Cout, cin_p)   per-tap fused phase weights (constant
            index_map -> VMEM-resident, fetched once).
    o_ref : (1, 1, s*s*Cout, cols)   phase-major, lane-dense (cols % 128 == 0)
            output block.
    """
    xt = x_ref[0, 0]                                   # (cin_p, (hb+U)*Wp)
    n_phase = o_ref.shape[2]
    acc = jnp.zeros((n_phase, cols), jnp.float32)
    # Per-tap accumulation: U*U tiny MXU dots instead of an im2col concatenate
    # of lane-misaligned slices (the MXU has huge slack at these shapes; the
    # vector relayout work was the bottleneck).  All offsets are static.
    for hh in range(U):
        for ww in range(U):
            off = hh * Wp + ww
            acc = acc + jnp.dot(w_ref[hh * U + ww], xt[:, off:off + cols],
                                preferred_element_type=jnp.float32)
    o_ref[0, 0] = acc.astype(o_ref.dtype)


def deconv2d_forward(x_nchw, weight=None, *, stride, kernel_size,
                     out_size=None, compute_dtype=None, row_block=None,
                     phase_weights=None):
    """Forward of Deconv2D (ConvTranspose2d, bias=False, no norm/activation).

    x_nchw        : (N, Cin, H, W)
    weight        : (Cin, Cout, K, K) PyTorch ConvTranspose2d layout (may be
                    None if `phase_weights` from precompute_phase_weights()
                    is supplied).
    compute_dtype : MXU operand dtype (e.g. jnp.bfloat16; valid on v5e/v6e/v7x
                    -- accumulation and the stored output stay float32-ish).
    returns       : (N, Cout, H*stride, W*stride)  NCHW.
    """
    N, Cin, H, W = x_nchw.shape
    K, s = kernel_size, stride
    p = same_padding(K, s) // 2

    if out_size is None:
        Ho, Wo = H * s, W * s
    else:
        Ho, Wo = out_size[-2], out_size[-1]
    base_h = (H - 1) * s - 2 * p + K
    base_w = (W - 1) * s - 2 * p + K
    oph, opw = Ho - base_h, Wo - base_w          # implicit output_padding
    if not (0 <= oph < s and 0 <= opw < s):
        # PyTorch's ConvTranspose2d rejects these output_size values too.
        raise ValueError("requested output size is not reachable with this "
                         "kernel/stride/padding configuration")
    if Ho != H * s or Wo != W * s:
        # TODO(synk): ragged phase grids (output_padding > 0) not implemented.
        raise NotImplementedError("only output_size == in_size*stride")

    _, U, pad_lo, pad_hi, _ = _phase_geometry(K, s, p)

    cd = x_nchw.dtype if compute_dtype is None else jnp.dtype(compute_dtype)
    out_dtype = x_nchw.dtype
    cd_bytes = jnp.dtype(cd).itemsize
    out_bytes = jnp.dtype(out_dtype).itemsize
    cin_p = _cin_pad(Cin, cd)

    if phase_weights is None:
        assert weight is not None, "need either weight or phase_weights"
        phase_weights = precompute_phase_weights(
            weight, kernel_size=K, stride=s, cin_pad=cin_p, compute_dtype=cd)
    phase_weights = phase_weights.astype(cd)
    n_phase = phase_weights.shape[1]
    Cout = n_phase // (s * s)
    assert phase_weights.shape == (U * U, n_phase, cin_p), phase_weights.shape

    def padded_cols(hb):
        # Smallest padded row width Wp >= W+U-1 with hb*Wp % 128 == 0, so the
        # output block's lane axis is a multiple of 128 (unmasked stores).
        wmin = W + U - 1
        g = 128 // math.gcd(hb, 128)
        return -(-wmin // g) * g

    def vmem_est(hb, Wp):
        in_blk = cin_p * (hb + U) * Wp * cd_bytes      # double-buffered
        out_blk = n_phase * hb * Wp * out_bytes        # double-buffered
        w_b = U * U * n_phase * cin_p * cd_bytes
        acc_b = n_phase * hb * Wp * 4
        return 2 * in_blk + 2 * out_blk + w_b + acc_b

    # Budget VMEM per TensorCore: safe against v7x's 64 MiB/TC (v5e/v6e have
    # 128 MiB and could take larger tiles, but 40 MiB keeps one code path).
    VMEM_BUDGET = 40 * 1024 * 1024
    if row_block is not None:
        assert H % row_block == 0, "row_block must divide H"
        hb = row_block
    else:
        divisors = sorted((d for d in range(1, H + 1) if H % d == 0),
                          reverse=True)
        hb = next((d for d in divisors
                   if vmem_est(d, padded_cols(d)) <= VMEM_BUDGET), 1)
    Wp = padded_cols(hb)
    nH = H // hb
    cols = hb * Wp
    # The (hb+U)-row block is exactly enough for the row taps plus the column
    # wrap of the (later cropped) last U-1 lanes of each row.  VMEM refs have
    # no runtime bounds check, so keep this assert tied to hb/U/Wp.
    assert (U - 1) * Wp + (U - 1) + hb * Wp <= (hb + U) * Wp

    # ---- input glue: planar NCHW (no NHWC transpose), zero-pad channels to a
    # full sublane group, zero-pad spatially (+1 tail row, + lane padding so
    # cols % 128 == 0), flatten (rows, cols) onto the 128-lane axis, and
    # pre-gather each row-block WITH its halo so a plain BlockSpec fetches it
    # (auto double-buffered).  nH == 1 -> no duplication at all.
    extra_w = Wp - (W + pad_lo + pad_hi)
    xp = jnp.pad(x_nchw.astype(cd),
                 ((0, 0), (0, cin_p - Cin),
                  (pad_lo, pad_hi + 1), (pad_lo, pad_hi + extra_w)))
    # xp: (N, cin_p, H+U, Wp)
    if nH == 1:
        x_blocks = xp.reshape(N, 1, cin_p, (H + U) * Wp)
    else:
        row_idx = np.arange(nH)[:, None] * hb + np.arange(hb + U)[None, :]
        xb = xp[:, :, row_idx, :]                       # (N, cin_p, nH, hb+U, Wp)
        x_blocks = jnp.transpose(xb, (0, 2, 1, 3, 4)).reshape(
            N, nH, cin_p, (hb + U) * Wp)

    kernel = functools.partial(_deconv_phase_kernel, U=U, Wp=Wp, cols=cols)

    est = vmem_est(hb, Wp)
    vmem_limit = int(min(max(2 * est, 16 * 1024 * 1024), 48 * 1024 * 1024))

    out_raw = pl.pallas_call(
        kernel,
        out_shape=jax.ShapeDtypeStruct((N, nH, n_phase, cols), out_dtype),
        grid_spec=pltpu.PrefetchScalarGridSpec(
            num_scalar_prefetch=0,
            grid=(N, nH),
            in_specs=[
                # haloed input blocks: normal BlockSpec -> pipelined DMA
                pl.BlockSpec((1, 1, cin_p, (hb + U) * Wp),
                             lambda n, b: (n, b, 0, 0)),
                # fused per-tap phase weights: constant index_map -> resident
                pl.BlockSpec((U * U, n_phase, cin_p), lambda n, b: (0, 0, 0)),
            ],
            out_specs=pl.BlockSpec((1, 1, n_phase, cols),
                                   lambda n, b: (n, b, 0, 0)),
        ),
        compiler_params=pltpu.CompilerParams(
            dimension_semantics=("parallel", "parallel"),  # v7x megacore
            vmem_limit_bytes=vmem_limit),
    )(x_blocks, phase_weights)

    # ---- epilogue: free dim-split reshape, then ONE fused crop + pixel
    # shuffle (phase interleave) back to NCHW.
    # TODO(synk): fold this interleave into the kernel's store (strided
    # sublane stores + even/odd lane swizzle) to save this HBM round trip.
    out6 = out_raw.reshape(N, nH, s, s, Cout, hb, Wp)[..., :W]
    out = out6.transpose(0, 4, 1, 5, 2, 6, 3).reshape(N, Cout, Ho, Wo)
    return out


def _ref_conv_transpose2d(x, w, stride, padding):
    """NumPy reference implementing PyTorch ConvTranspose2d scatter semantics."""
    N, Cin, H, W = x.shape
    Cout, K = w.shape[1], w.shape[2]
    OH = (H - 1) * stride - 2 * padding + K
    OW = (W - 1) * stride - 2 * padding + K
    full = np.zeros((N, Cout, (H - 1) * stride + K, (W - 1) * stride + K),
                    np.float64)
    for n in range(N):
        for ih in range(H):
            for iw in range(W):
                full[n, :, ih * stride:ih * stride + K,
                     iw * stride:iw * stride + K] += np.einsum(
                         "i,iokl->okl", x[n, :, ih, iw], w)
    return full[:, :, padding:padding + OH,
                padding:padding + OW].astype(np.float32)


if __name__ == "__main__":
    # Deconv2D(in_channels=4, out_channels=8, in_size=(16, 16),
    #          kernel_size=4, stride=2, bias=False)
    N, Cin, Cout = 2, 4, 8
    H = W = 16
    K, s = 4, 2

    key = jax.random.PRNGKey(0)
    kx, kw = jax.random.split(key)
    x = jax.random.normal(kx, (N, Cin, H, W), jnp.float32)
    # ConvTranspose2d weight shape: (in_channels, out_channels, kH, kW)
    weight = jax.random.normal(kw, (Cin, Cout, K, K), jnp.float32) * 0.1

    ref = _ref_conv_transpose2d(np.asarray(x), np.asarray(weight),
                                s, same_padding(K, s) // 2)

    # ---- f32 MXU operands (exact path); weight transform hoisted to "init".
    w_phase_f32 = precompute_phase_weights(
        weight, kernel_size=K, stride=s,
        cin_pad=_cin_pad(Cin, jnp.float32), compute_dtype=jnp.float32)
    fwd = jax.jit(lambda xx, ww: deconv2d_forward(
        xx, stride=s, kernel_size=K, phase_weights=ww))
    out = jax.block_until_ready(fwd(x, w_phase_f32))
    assert out.shape == (N, Cout, H * s, W * s), out.shape
    np.testing.assert_allclose(np.asarray(out), ref, rtol=1e-4, atol=1e-4)

    # ---- bf16 MXU operands, f32 accumulation.  Valid on v5e/v6e/v7x: bf16 is
    # only used for data movement + MXU operands (no bf16 VPU arithmetic), so
    # the only effect is ~1e-2-level rounding of the inputs/weights.
    w_phase_bf16 = precompute_phase_weights(
        weight, kernel_size=K, stride=s,
        cin_pad=_cin_pad(Cin, jnp.bfloat16), compute_dtype=jnp.bfloat16)
    out_bf16 = jax.block_until_ready(deconv2d_forward(
        x, stride=s, kernel_size=K, compute_dtype=jnp.bfloat16,
        phase_weights=w_phase_bf16))
    np.testing.assert_allclose(np.asarray(out_bf16), ref, rtol=5e-2, atol=5e-2)

    print("KERNEL_OK")
</pallas_src>

<mosaic_0001>
module attributes {stable_mosaic.version = 11 : i64} {
  func.func @_deconv_phase_kernel(%arg0: i32, %arg1: i32, %arg2: memref<1x1x8x456xf32, #tpu.memory_space<vmem>>, %arg3: memref<9x32x8xf32, #tpu.memory_space<vmem>>, %arg4: memref<1x1x32x384xf32, #tpu.memory_space<vmem>>) attributes {dimension_semantics = [#tpu.dimension_semantics<parallel>, #tpu.dimension_semantics<parallel>], iteration_bounds = array<i64: 2, 1>, scalar_prefetch = 0 : i64, scratch_operands = 0 : i64, tpu.core_type = #tpu.core_type<tc>, window_params = [{transform_indices = @transform_0, window_bounds = array<i64: 1, 1, 8, 456>}, {pipeline_mode = #tpu.pipeline_mode<synchronous>, transform_indices = @transform_1, window_bounds = array<i64: 9, 32, 8>}, {transform_indices = @transform_2, window_bounds = array<i64: 1, 1, 32, 384>}]} {
    %c0 = arith.constant 0 : index
    %c0_0 = arith.constant 0 : index
    %c0_1 = arith.constant 0 : index
    %c0_2 = arith.constant 0 : index
    %0 = vector.load %arg2[%c0, %c0_0, %c0_1, %c0_2] : memref<1x1x8x456xf32, #tpu.memory_space<vmem>>, vector<1x1x8x456xf32>
    %1 = vector.shape_cast %0 : vector<1x1x8x456xf32> to vector<8x456xf32>
    %cst = arith.constant 0.000000e+00 : f32
    %2 = vector.broadcast %cst : f32 to vector<32x384xf32>
    %c0_3 = arith.constant 0 : index
    %c0_4 = arith.constant 0 : index
    %c0_5 = arith.constant 0 : index
    %3 = vector.load %arg3[%c0_3, %c0_4, %c0_5] : memref<9x32x8xf32, #tpu.memory_space<vmem>>, vector<1x32x8xf32>
    %4 = vector.shape_cast %3 : vector<1x32x8xf32> to vector<32x8xf32>
    %5 = vector.extract_strided_slice %1 {offsets = [0, 0], sizes = [8, 384], strides = [1, 1]} : vector<8x456xf32> to vector<8x384xf32>
    %cst_6 = arith.constant dense<0.000000e+00> : vector<32x384xf32>
    %6 = tpu.matmul %4, %5, %cst_6 {dimension_numbers = #tpu.dot_dimension_numbers<[1], [0], [0], [1], [0, 0, 1, 1], [], []>} : vector<32x8xf32>, vector<8x384xf32>, vector<32x384xf32> -> vector<32x384xf32>
    %7 = arith.addf %2, %6 : vector<32x384xf32>
    %c1 = arith.constant 1 : index
    %c0_7 = arith.constant 0 : index
    %c0_8 = arith.constant 0 : index
    %8 = vector.load %arg3[%c1, %c0_7, %c0_8] : memref<9x32x8xf32, #tpu.memory_space<vmem>>, vector<1x32x8xf32>
    %9 = vector.shape_cast %8 : vector<1x32x8xf32> to vector<32x8xf32>
    %10 = vector.extract_strided_slice %1 {offsets = [0, 1], sizes = [8, 384], strides = [1, 1]} : vector<8x456xf32> to vector<8x384xf32>
    %cst_9 = arith.constant dense<0.000000e+00> : vector<32x384xf32>
    %11 = tpu.matmul %9, %10, %cst_9 {dimension_numbers = #tpu.dot_dimension_numbers<[1], [0], [0], [1], [0, 0, 1, 1], [], []>} : vector<32x8xf32>, vector<8x384xf32>, vector<32x384xf32> -> vector<32x384xf32>
    %12 = arith.addf %7, %11 : vector<32x384xf32>
    %c2 = arith.constant 2 : index
    %c0_10 = arith.constant 0 : index
    %c0_11 = arith.constant 0 : index
    %13 = vector.load %arg3[%c2, %c0_10, %c0_11] : memref<9x32x8xf32, #tpu.memory_space<vmem>>, vector<1x32x8xf32>
    %14 = vector.shape_cast %13 : vector<1x32x8xf32> to vector<32x8xf32>
    %15 = vector.extract_strided_slice %1 {offsets = [0, 2], sizes = [8, 384], strides = [1, 1]} : vector<8x456xf32> to vector<8x384xf32>
    %cst_12 = arith.constant dense<0.000000e+00> : vector<32x384xf32>
    %16 = tpu.matmul %14, %15, %cst_12 {dimension_numbers = #tpu.dot_dimension_numbers<[1], [0], [0], [1], [0, 0, 1, 1], [], []>} : vector<32x8xf32>, vector<8x384xf32>, vector<32x384xf32> -> vector<32x384xf32>
    %17 = arith.addf %12, %16 : vector<32x384xf32>
    %c3 = arith.constant 3 : index
    %c0_13 = arith.constant 0 : index
    %c0_14 = arith.constant 0 : index
    %18 = vector.load %arg3[%c3, %c0_13, %c0_14] : memref<9x32x8xf32, #tpu.memory_space<vmem>>, vector<1x32x8xf32>
    %19 = vector.shape_cast %18 : vector<1x32x8xf32> to vector<32x8xf32>
    %20 = vector.extract_strided_slice %1 {offsets = [0, 24], sizes = [8, 384], strides = [1, 1]} : vector<8x456xf32> to vector<8x384xf32>
    %cst_15 = arith.constant dense<0.000000e+00> : vector<32x384xf32>
    %21 = tpu.matmul %19, %20, %cst_15 {dimension_numbers = #tpu.dot_dimension_numbers<[1], [0], [0], [1], [0, 0, 1, 1], [], []>} : vector<32x8xf32>, vector<8x384xf32>, vector<32x384xf32> -> vector<32x384xf32>
    %22 = arith.addf %17, %21 : vector<32x384xf32>
    %c4 = arith.constant 4 : index
    %c0_16 = arith.constant 0 : index
    %c0_17 = arith.constant 0 : index
    %23 = vector.load %arg3[%c4, %c0_16, %c0_17] : memref<9x32x8xf32, #tpu.memory_space<vmem>>, vector<1x32x8xf32>
    %24 = vector.shape_cast %23 : vector<1x32x8xf32> to vector<32x8xf32>
    %25 = vector.extract_strided_slice %1 {offsets = [0, 25], sizes = [8, 384], strides = [1, 1]} : vector<8x456xf32> to vector<8x384xf32>
    %cst_18 = arith.constant dense<0.000000e+00> : vector<32x384xf32>
    %26 = tpu.matmul %24, %25, %cst_18 {dimension_numbers = #tpu.dot_dimension_numbers<[1], [0], [0], [1], [0, 0, 1, 1], [], []>} : vector<32x8xf32>, vector<8x384xf32>, vector<32x384xf32> -> vector<32x384xf32>
    %27 = arith.addf %22, %26 : vector<32x384xf32>
    %c5 = arith.constant 5 : index
    %c0_19 = arith.constant 0 : index
    %c0_20 = arith.constant 0 : index
    %28 = vector.load %arg3[%c5, %c0_19, %c0_20] : memref<9x32x8xf32, #tpu.memory_space<vmem>>, vector<1x32x8xf32>
    %29 = vector.shape_cast %28 : vector<1x32x8xf32> to vector<32x8xf32>
    %30 = vector.extract_strided_slice %1 {offsets = [0, 26], sizes = [8, 384], strides = [1, 1]} : vector<8x456xf32> to vector<8x384xf32>
    %cst_21 = arith.constant dense<0.000000e+00> : vector<32x384xf32>
    %31 = tpu.matmul %29, %30, %cst_21 {dimension_numbers = #tpu.dot_dimension_numbers<[1], [0], [0], [1], [0, 0, 1, 1], [], []>} : vector<32x8xf32>, vector<8x384xf32>, vector<32x384xf32> -> vector<32x384xf32>
    %32 = arith.addf %27, %31 : vector<32x384xf32>
    %c6 = arith.constant 6 : index
    %c0_22 = arith.constant 0 : index
    %c0_23 = arith.constant 0 : index
    %33 = vector.load %arg3[%c6, %c0_22, %c0_23] : memref<9x32x8xf32, #tpu.memory_space<vmem>>, vector<1x32x8xf32>
    %34 = vector.shape_cast %33 : vector<1x32x8xf32> to vector<32x8xf32>
    %35 = vector.extract_strided_slice %1 {offsets = [0, 48], sizes = [8, 384], strides = [1, 1]} : vector<8x456xf32> to vector<8x384xf32>
    %cst_24 = arith.constant dense<0.000000e+00> : vector<32x384xf32>
    %36 = tpu.matmul %34, %35, %cst_24 {dimension_numbers = #tpu.dot_dimension_numbers<[1], [0], [0], [1], [0, 0, 1, 1], [], []>} : vector<32x8xf32>, vector<8x384xf32>, vector<32x384xf32> -> vector<32x384xf32>
    %37 = arith.addf %32, %36 : vector<32x384xf32>
    %c7 = arith.constant 7 : index
    %c0_25 = arith.constant 0 : index
    %c0_26 = arith.constant 0 : index
    %38 = vector.load %arg3[%c7, %c0_25, %c0_26] : memref<9x32x8xf32, #tpu.memory_space<vmem>>, vector<1x32x8xf32>
    %39 = vector.shape_cast %38 : vector<1x32x8xf32> to vector<32x8xf32>
    %40 = vector.extract_strided_slice %1 {offsets = [0, 49], sizes = [8, 384], strides = [1, 1]} : vector<8x456xf32> to vector<8x384xf32>
    %cst_27 = arith.constant dense<0.000000e+00> : vector<32x384xf32>
    %41 = tpu.matmul %39, %40, %cst_27 {dimension_numbers = #tpu.dot_dimension_numbers<[1], [0], [0], [1], [0, 0, 1, 1], [], []>} : vector<32x8xf32>, vector<8x384xf32>, vector<32x384xf32> -> vector<32x384xf32>
    %42 = arith.addf %37, %41 : vector<32x384xf32>
    %c8 = arith.constant 8 : index
    %c0_28 = arith.constant 0 : index
    %c0_29 = arith.constant 0 : index
    %43 = vector.load %arg3[%c8, %c0_28, %c0_29] : memref<9x32x8xf32, #tpu.memory_space<vmem>>, vector<1x32x8xf32>
    %44 = vector.shape_cast %43 : vector<1x32x8xf32> to vector<32x8xf32>
    %45 = vector.extract_strided_slice %1 {offsets = [0, 50], sizes = [8, 384], strides = [1, 1]} : vector<8x456xf32> to vector<8x384xf32>
    %cst_30 = arith.constant dense<0.000000e+00> : vector<32x384xf32>
    %46 = tpu.matmul %44, %45, %cst_30 {dimension_numbers = #tpu.dot_dimension_numbers<[1], [0], [0], [1], [0, 0, 1, 1], [], []>} : vector<32x8xf32>, vector<8x384xf32>, vector<32x384xf32> -> vector<32x384xf32>
    %47 = arith.addf %42, %46 : vector<32x384xf32>
    %c0_31 = arith.constant 0 : index
    %c0_32 = arith.constant 0 : index
    %c0_33 = arith.constant 0 : index
    %c0_34 = arith.constant 0 : index
    %48 = vector.load %arg4[%c0_31, %c0_32, %c0_33, %c0_34] : memref<1x1x32x384xf32, #tpu.memory_space<vmem>>, vector<1x1x32x384xf32>
    %49 = vector.shape_cast %48 : vector<1x1x32x384xf32> to vector<32x384xf32>
    %50 = vector.shape_cast %47 : vector<32x384xf32> to vector<1x1x32x384xf32>
    tpu.vector_store %arg4[%c0_31, %c0_32, %c0_33, %c0_34], %50 {strides = array<i32>} : memref<1x1x32x384xf32, #tpu.memory_space<vmem>>, vector<1x1x32x384xf32>,
    return
  }
  func.func @transform_0(%arg0: i32, %arg1: i32) -> (i32, i32, i32, i32) {
    %c0_i32 = arith.constant 0 : i32
    %c0_i32_0 = arith.constant 0 : i32
    %c0_i32_1 = arith.constant 0 : i32
    return %arg0, %arg1, %c0_i32, %c0_i32_0 : i32, i32, i32, i32
  }
  func.func @transform_1(%arg0: i32, %arg1: i32) -> (i32, i32, i32) {
    %c0_i32 = arith.constant 0 : i32
    %c0_i32_0 = arith.constant 0 : i32
    %c0_i32_1 = arith.constant 0 : i32
    %c0_i32_2 = arith.constant 0 : i32
    return %c0_i32, %c0_i32_0, %c0_i32_1 : i32, i32, i32
  }
  func.func @transform_2(%arg0: i32, %arg1: i32) -> (i32, i32, i32, i32) {
    %c0_i32 = arith.constant 0 : i32
    %c0_i32_0 = arith.constant 0 : i32
    %c0_i32_1 = arith.constant 0 : i32
    return %arg0, %arg1, %c0_i32, %c0_i32_0 : i32, i32, i32, i32
  }
}

</mosaic_0001>

<llo_original>
// kernel: _lambda_.1
$region0: #{_lambda_.1}
  #allocation0 [shape = 'u32[]', space=smem, size = 0x4, offset = 0x4, fixed_abs, tag = 'smem constant byte address 0x4 - core index']
  #allocation1 [shape = 'u32[144,128]{1,0:T(1,128)}', space=vmem, size = 0x12000, scoped, tag = 'internal scratch']
  %s0 = inlined_call_operand.vmem [shape: f32[2,1,8,456], index: 0, kind: input, shape index: {}]
  %s1 = inlined_call_operand.vmem [shape: f32[9,32,8], index: 1, kind: input, shape index: {}]
  %s2 = inlined_call_operand.vmem [shape: f32[2,1,32,384], index: 2, kind: output, shape index: {}]
  %s3 = sld [smem:[#allocation0]]
  $region41: #{_lambda_.1} parent=0
    _
  %s5 = ssub.s32 1, %s3
  %s6 = scalar_select 0, %s5, %s3
  loop: start=0, step=1, limit=4
  $region2: #{_lambda_.1} parent=0 // loop_pre_header
    _
  $region3: #{_lambda_.1} parent=0 // loop_header
    %s8 = sphi 0, %s12
    %p9 = scmp.ge.s32.totalorder %s8, 4
    %s15 = sphi 0, %s27
    %s16 = sphi 0, %s23
    %s17 = sphi 0, %s15
    %s18 = sphi 0, %s16
    %s19 = sphi 0, %s17
    %s20 = sphi 0, %s18
    %s32 = sphi 0, %s34
    %s35 = sphi 0, %s32
    %s36 = sphi 0, %s35
    %s52 = sphi 0, %s36
    %s56 = sphi 0, %s56
    %s58 = sphi 0, %s56
    %s59 = sphi 0, %s58
    %s73 = sphi 0, %s59
    %s81 = sphi 0, %s83
    %s84 = sphi 0, %s81
    %s85 = sphi 0, %s84
    %s101 = sphi 0, %s85
  $region4: #{_lambda_.1} parent=0 // loop_header_branch
    %11 = sbr.rel (%p9) target = $region8
  $region5: #{_lambda_.1} parent=0 // loop_body
    %s13 = ssub.s32 %s8, 1
    %s14 = ssub.s32 %s8, 2
    %s21 = sadd.s32 1, %s16
    %p22 = scmp.ge.s32.totalorder %s21, 1
    %s23 = scalar_select %p22, 0, %s21
    %s24 = sadd.s32 1, %s15
    %s25 = scalar_select %p22, %s24, %s15
    %p26 = scmp.ge.s32.totalorder %s25, 2
    %s27 = scalar_select %p26, 0, %s25
    %s28 = ssub.s32 %s15, %s27
    %s29 = ssub.s32 %s16, %s23
    %s30 = sor.u32 %s28, %s29
    %p31 = scmp.eq.s32.totalorder %s30, 0
    %s33 = sadd.s32 %s32, 1
    %s34 = scalar_select %p31, %s32, %s33
    %p37 = pneg %p31
    %p38 = scmp.eq.s32.totalorder %s8, 1
    %p39 = por %p37, %p38
    %p40 = scmp.ne.s32.totalorder %s32, %s35
    %p41 = scmp.eq.s32.totalorder %s8, 0
    %p42 = por %p40, %p41
    %p43 = scmp.ne.s32.totalorder %s32, %s35
    %p44 = scmp.eq.s32.totalorder %s13, 1
    %p45 = por %p43, %p44
    %p46 = scmp.ne.s32.totalorder %s35, %s36
    %p47 = scmp.eq.s32.totalorder %s13, 0
    %p48 = por %p46, %p47
    %p49 = scmp.ne.s32.totalorder %s35, %s36
    %p50 = scmp.eq.s32.totalorder %s14, 1
    %p51 = por %p49, %p50
    %p53 = scmp.ne.s32.totalorder %s36, %s52
    %p54 = scmp.eq.s32.totalorder %s14, 0
    %p55 = por %p53, %p54
    %s57 = sadd.s32 %s56, 1
    %p60 = scmp.eq.s32.totalorder %s8, 1
    %p61 = scmp.ne.s32.totalorder %s56, %s58
    %p62 = scmp.eq.s32.totalorder %s8, 0
    %p63 = por %p61, %p62
    %p64 = scmp.ne.s32.totalorder %s56, %s58
    %p65 = scmp.eq.s32.totalorder %s13, 1
    %p66 = por %p64, %p65
    %p67 = scmp.ne.s32.totalorder %s58, %s59
    %p68 = scmp.eq.s32.totalorder %s13, 0
    %p69 = por %p67, %p68
    %p70 = scmp.ne.s32.totalorder %s58, %s59
    %p71 = scmp.eq.s32.totalorder %s14, 1
    %p72 = por %p70, %p71
    %p74 = scmp.ne.s32.totalorder %s59, %s73
    %p75 = scmp.eq.s32.totalorder %s14, 0
    %p76 = por %p74, %p75
    %s77 = ssub.s32 %s15, %s27
    %s78 = ssub.s32 %s16, %s23
    %s79 = sor.u32 %s77, %s78
    %p80 = scmp.eq.s32.totalorder %s79, 0
    %s82 = sadd.s32 %s81, 1
    %s83 = scalar_select %p80, %s81, %s82
    %p86 = pneg %p80
    %p87 = scmp.eq.s32.totalorder %s8, 1
    %p88 = por %p86, %p87
    %p89 = scmp.ne.s32.totalorder %s81, %s84
    %p90 = scmp.eq.s32.totalorder %s8, 0
    %p91 = por %p89, %p90
    %p92 = scmp.ne.s32.totalorder %s81, %s84
    %p93 = scmp.eq.s32.totalorder %s13, 1
    %p94 = por %p92, %p93
    %p95 = scmp.ne.s32.totalorder %s84, %s85
    %p96 = scmp.eq.s32.totalorder %s13, 0
    %p97 = por %p95, %p96
    %p98 = scmp.ne.s32.totalorder %s84, %s85
    %p99 = scmp.eq.s32.totalorder %s14, 1
    %p100 = por %p98, %p99
    %p102 = scmp.ne.s32.totalorder %s85, %s101
    %p103 = scmp.eq.s32.totalorder %s14, 0
    %p104 = por %p102, %p103
    %p105 = scmp.le.s32.totalorder 1, %s8
    %p106 = scmp.lt.s32.totalorder %s8, 3
    %p107 = pnand %p105, %p106
    %p108 = pneg %p107
    // Predicated region
    $region9: #{_lambda_.1} parent=5 // pred_check
      _
    $region10: #{_lambda_.1} parent=5 // pred_check_branch
      %110 = sbr.rel (%p107) target = $region12
    $region11: #{_lambda_.1} parent=5 // pred_region
      %s111 = ssub.s32 %s8, 1
      // Predicated region
      $region13: #{_lambda_.1} parent=11 // pred_check
        %p112 = pneg %p69
      $region14: #{_lambda_.1} parent=11 // pred_check_branch
        %114 = sbr.rel (%p112) target = $region16
      $region15: #{_lambda_.1} parent=11 // pred_region
        _
      $region16: #{_lambda_.1} parent=11 // pred_fallthru
        _
    $region12: #{_lambda_.1} parent=5 // pred_fallthru
      _
    %p115 = scmp.lt.s32.totalorder %s8, 2
    // Predicated region
    $region17: #{_lambda_.1} parent=5 // pred_check
      %p116 = pneg %p115
    $region18: #{_lambda_.1} parent=5 // pred_check_branch
      %118 = sbr.rel (%p116) target = $region20
    $region19: #{_lambda_.1} parent=5 // pred_region
      // Predicated region
      $region21: #{_lambda_.1} parent=19 // pred_check
        %p119 = pneg %p42
      $region22: #{_lambda_.1} parent=19 // pred_check_branch
        %121 = sbr.rel (%p119) target = $region24
      $region23: #{_lambda_.1} parent=19 // pred_region
        %p122 = scmp.lt.s32.totalorder %s15, 1
        %s123 = scalar_select %p122, %s15, 1
        %p124 = scmp.lt.s32.totalorder %s16, 0
        %s125 = scalar_select %p124, %s16, 0
        %s126 = smul.addr %s125, 4
        %s127 = smul.addr %s123, 4
        %s128 = sadd.s32 %s126, %s127
        %s129 = smul.addr %s128, 8
        %s130 = scalar_lea.vmem %s0, %s129
      $region24: #{_lambda_.1} parent=19 // pred_fallthru
        _
    $region20: #{_lambda_.1} parent=5 // pred_fallthru
      _
    %p131 = scmp.le.s32.totalorder 1, %s8
    %p132 = scmp.lt.s32.totalorder %s8, 3
    %p133 = pnand %p131, %p132
    %p134 = pneg %p133
    // Predicated region
    $region25: #{_lambda_.1} parent=5 // pred_check
      _
    $region26: #{_lambda_.1} parent=5 // pred_check_branch
      %136 = sbr.rel (%p133) target = $region28
    $region27: #{_lambda_.1} parent=5 // pred_region
      %s137 = ssub.s32 %s8, 1
      %p138 = scmp.lt.s32.totalorder %s17, 1
      %s139 = scalar_select %p138, %s17, 1
      %p140 = scmp.lt.s32.totalorder %s18, 0
      %s141 = scalar_select %p140, %s18, 0
      %s142 = smul.addr %s141, 4
      %s143 = smul.addr %s139, 4
      %s144 = sadd.s32 %s142, %s143
      %s145 = smul.addr %s144, 8
      %s146 = scalar_lea.vmem %s0, %s145
      %p147 = pneg %p48
      %p148 = pneg %p45
      %p149 = pneg %p69
      %p150 = pneg %p66
      %p151 = pneg %p97
      %p152 = pneg %p94
      %p153 = scmp.lt.s32.totalorder %s17, 1
      %s154 = scalar_select %p153, %s17, 1
      %p155 = scmp.lt.s32.totalorder %s18, 0
      %s156 = scalar_select %p155, %s18, 0
      %s157 = smul.addr %s156, 12
      %s158 = smul.addr %s154, 12
      %s159 = sadd.s32 %s157, %s158
      %s160 = smul.addr %s159, 8
      %s161 = scalar_lea.vmem %s2, %s160
      %p162 = scmp.lt.s32.totalorder %s17, 1
      %s163 = scalar_select %p162, %s17, 1
      %p164 = scmp.lt.s32.totalorder %s18, 0
      %s165 = scalar_select %p164, %s18, 0
      %s166 = smul.addr %s165, 4
      %s167 = smul.addr %s163, 4
      %s168 = sadd.s32 %s166, %s167
      %s169 = smul.addr %s168, 8
      %s170 = scalar_lea.vmem %s0, %s169
      %p171 = scmp.lt.s32.totalorder %s17, 1
      %s172 = scalar_select %p171, %s17, 1
      %p173 = scmp.lt.s32.totalorder %s18, 0
      %s174 = scalar_select %p173, %s18, 0
      %s175 = smul.addr %s174, 12
      %s176 = smul.addr %s172, 12
      %s177 = sadd.s32 %s175, %s176
      %s178 = smul.addr %s177, 8
      %s179 = scalar_lea.vmem %s2, %s178
      %v180 = vld [vmem:[%s170] sm:$0xff]
      %v181 = vld [vmem:[%s170 + $0x8] sm:$0xff]
      %v182 = vld [vmem:[%s170 + $0x10] sm:$0xff]
      %v183 = vld [vmem:[%s170 + $0x18] sm:$0xff]
      %v184 = vld [vmem:[%s1] sm:$0xff]
      %v185 = vld [vmem:[%s1 + $0x8] sm:$0xff]
      %v186 = vld [vmem:[%s1 + $0x10] sm:$0xff]
      %v187 = vld [vmem:[%s1 + $0x18] sm:$0xff]
      %s188 = scalar_lea.vmem %s1, 32
      %v189 = vld [vmem:[%s188] sm:$0xff]
      %v190 = vld [vmem:[%s188 + $0x8] sm:$0xff]
      %v191 = vld [vmem:[%s188 + $0x10] sm:$0xff]
      %v192 = vld [vmem:[%s188 + $0x18] sm:$0xff]
      %197 = vrot.lane.b32.xlu0 %v180, 127
      %v198 = vpop.permute.xlu0 %197
      %199 = vrot.lane.b32.xlu0 %v181, 127
      %v200 = vpop.permute.xlu0 %199
      %201 = vrot.lane.b32.xlu0 %v182, 127
      %v202 = vpop.permute.xlu0 %201
      %203 = vrot.lane.b32.xlu0 %v183, 127
      %v204 = vpop.permute.xlu0 %203
      %vm205 = vcmask 1039360
      %v206 = vsel %vm205, %v198, %v200
      %v207 = vsel %vm205, %v200, %v202
      %v208 = vsel %vm205, %v202, %v204
      %vm212 = vcmask 64512
      %v214 = vsel %vm212, %v189, 0
      %v217 = vsel %vm212, %v190, 0
      %v220 = vsel %vm212, %v191, 0
      %v223 = vsel %vm212, %v192, 0
      %225 = vmatprep.subr.mxu0 %v207
      %226 = vmatpush1.msra.mxu0 %v206
      %227 = vmatprep.subr.mxu0 0.0
      %228 = vmatpush1.msra.mxu0 0.0
      %229 = vmatprep.subr.mxu0 0.0
      %230 = vmatpush1.msra.mxu0 0.0
      %231 = vmatprep.subr.mxu0 0.0
      %232 = vmatpush1.msra.mxu0 0.0
      %233 = vmatprep.subr.mxu0 0.0
      %234 = vmatpush1.msra.mxu0 0.0
      %235 = vmatprep.subr.mxu0 0.0
      %236 = vmatpush1.msra.mxu0 0.0
      %237 = vmatprep.subr.mxu0 0.0
      %238 = vmatpush1.msra.mxu0 0.0
      %239 = vmatprep.subr.mxu0 0.0
      %240 = vmatpush1.msra.mxu0 0.0
      %241 = vmatprep.subr.mxu0 0.0
      %242 = vmatpush1.msra.mxu0 0.0
      %243 = vmatprep.subr.mxu0 0.0
      %244 = vmatpush1.msra.mxu0 0.0
      %245 = vmatprep.subr.mxu0 0.0
      %246 = vmatpush1.msra.mxu0 0.0
      %247 = vmatprep.subr.mxu0 0.0
      %248 = vmatpush1.msra.mxu0 0.0
      %249 = vmatprep.subr.mxu0 0.0
      %250 = vmatpush1.msra.mxu0 0.0
      %251 = vmatprep.subr.mxu0 0.0
      %252 = vmatpush1.msra.mxu0 0.0
      %253 = vmatprep.subr.mxu0 0.0
      %254 = vmatpush1.msra.mxu0 0.0
      %255 = vmatprep.subr.mxu0 0.0
      %256 = vmatpush1.msra.mxu0 0.0
      %257 = vmatprep.subr.mxu0 0.0
      %258 = vmatpush1.msra.mxu0 0.0
      %259 = vmatprep.subr.mxu0 0.0
      %260 = vmatpush1.msra.mxu0 0.0
      %261 = vmatprep.subr.mxu0 0.0
      %262 = vmatpush1.msra.mxu0 0.0
      %263 = vmatprep.subr.mxu0 0.0
      %264 = vmatpush1.msra.mxu0 0.0
      %265 = vmatprep.subr.mxu0 0.0
      %266 = vmatpush1.msra.mxu0 0.0
      %267 = vmatprep.subr.mxu0 0.0
      %268 = vmatpush1.msra.mxu0 0.0
      %269 = vmatprep.subr.mxu0 0.0
      %270 = vmatpush1.msra.mxu0 0.0
      %271 = vmatprep.subr.mxu0 0.0
      %272 = vmatpush1.msra.mxu0 0.0
      %273 = vmatprep.subr.mxu0 0.0
      %274 = vmatpush1.msra.mxu0 0.0
      %275 = vmatprep.subr.mxu0 0.0
      %276 = vmatpush1.msra.mxu0 0.0
      %277 = vmatprep.subr.mxu0 0.0
      %278 = vmatpush1.msra.mxu0 0.0
      %279 = vmatprep.subr.mxu0 0.0
      %280 = vmatpush1.msra.mxu0 0.0
      %281 = vmatprep.subr.mxu0 0.0
      %282 = vmatpush1.msra.mxu0 0.0
      %283 = vmatprep.subr.mxu0 0.0
      %284 = vmatpush1.msra.mxu0 0.0
      %285 = vmatprep.subr.mxu0 0.0
      %286 = vmatpush1.msra.mxu0 0.0
      %287 = vmatprep.subr.mxu0 0.0
      %288 = vmatpush1.msra.mxu0 0.0
      %289 = vmatprep.mubr.f32.mxu0 0.0
      %290 = vmatmul.mubr.f32.gmra.mrb[0].mxu0 %v214
      %v291 = vpop.f32.mrb[0].mxu0
      %v292 = vadd.f32 0.0, %v291
      %v293 = vpop.f32.mrb[0].mxu0
      %v294 = vadd.f32 0.0, %v293
      %295 = vmatprep.mubr.f32.mxu0 0.0
      %296 = vmatmul.mubr.f32.gmra.mrb[0].mxu0 %v217
      %v297 = vpop.f32.mrb[0].mxu0
      %v298 = vadd.f32 0.0, %v297
      %v299 = vpop.f32.mrb[0].mxu0
      %v300 = vadd.f32 0.0, %v299
      %301 = vmatprep.mubr.f32.mxu0 0.0
      %302 = vmatmul.mubr.f32.gmra.mrb[0].mxu0 %v220
      %v303 = vpop.f32.mrb[0].mxu0
      %v304 = vadd.f32 0.0, %v303
      %v305 = vpop.f32.mrb[0].mxu0
      %v306 = vadd.f32 0.0, %v305
      %307 = vmatprep.mubr.f32.mxu0 0.0
      %308 = vmatmul.mubr.f32.gmra.mrb[0].mxu0 %v223
      %v309 = vpop.f32.mrb[0].mxu0
      %v310 = vadd.f32 0.0, %v309
      %v311 = vpop.f32.mrb[0].mxu0
      %v312 = vadd.f32 0.0, %v311
      %313 = vdwg.mxu0
      %314 = vmatprep.subr.mxu0 0.0
      %315 = vmatpush1.msra.mxu0 %v208
      %316 = vmatprep.subr.mxu0 0.0
      %317 = vmatpush1.msra.mxu0 0.0
      %318 = vmatprep.subr.mxu0 0.0
      %319 = vmatpush1.msra.mxu0 0.0
      %320 = vmatprep.subr.mxu0 0.0
      %321 = vmatpush1.msra.mxu0 0.0
      %322 = vmatprep.subr.mxu0 0.0
      %323 = vmatpush1.msra.mxu0 0.0
      %324 = vmatprep.subr.mxu0 0.0
      %325 = vmatpush1.msra.mxu0 0.0
      %326 = vmatprep.subr.mxu0 0.0
      %327 = vmatpush1.msra.mxu0 0.0
      %328 = vmatprep.subr.mxu0 0.0
      %329 = vmatpush1.msra.mxu0 0.0
      %330 = vmatprep.subr.mxu0 0.0
      %331 = vmatpush1.msra.mxu0 0.0
      %332 = vmatprep.subr.mxu0 0.0
      %333 = vmatpush1.msra.mxu0 0.0
      %334 = vmatprep.subr.mxu0 0.0
      %335 = vmatpush1.msra.mxu0 0.0
      %336 = vmatprep.subr.mxu0 0.0
      %337 = vmatpush1.msra.mxu0 0.0
      %338 = vmatprep.subr.mxu0 0.0
      %339 = vmatpush1.msra.mxu0 0.0
      %340 = vmatprep.subr.mxu0 0.0
      %341 = vmatpush1.msra.mxu0 0.0
      %342 = vmatprep.subr.mxu0 0.0
      %343 = vmatpush1.msra.mxu0 0.0
      %344 = vmatprep.subr.mxu0 0.0
      %345 = vmatpush1.msra.mxu0 0.0
      %346 = vmatprep.subr.mxu0 0.0
      %347 = vmatpush1.msra.mxu0 0.0
      %348 = vmatprep.subr.mxu0 0.0
      %349 = vmatpush1.msra.mxu0 0.0
      %350 = vmatprep.subr.mxu0 0.0
      %351 = vmatpush1.msra.mxu0 0.0
      %352 = vmatprep.subr.mxu0 0.0
      %353 = vmatpush1.msra.mxu0 0.0
      %354 = vmatprep.subr.mxu0 0.0
      %355 = vmatpush1.msra.mxu0 0.0
      %356 = vmatprep.subr.mxu0 0.0
      %357 = vmatpush1.msra.mxu0 0.0
      %358 = vmatprep.subr.mxu0 0.0
      %359 = vmatpush1.msra.mxu0 0.0
      %360 = vmatprep.subr.mxu0 0.0
      %361 = vmatpush1.msra.mxu0 0.0
      %362 = vmatprep.subr.mxu0 0.0
      %363 = vmatpush1.msra.mxu0 0.0
      %364 = vmatprep.subr.mxu0 0.0
      %365 = vmatpush1.msra.mxu0 0.0
      %366 = vmatprep.subr.mxu0 0.0
      %367 = vmatpush1.msra.mxu0 0.0
      %368 = vmatprep.subr.mxu0 0.0
      %369 = vmatpush1.msra.mxu0 0.0
      %370 = vmatprep.subr.mxu0 0.0
      %371 = vmatpush1.msra.mxu0 0.0
      %372 = vmatprep.subr.mxu0 0.0
      %373 = vmatpush1.msra.mxu0 0.0
      %374 = vmatprep.subr.mxu0 0.0
      %375 = vmatpush1.msra.mxu0 0.0
      %376 = vmatprep.subr.mxu0 0.0
      %377 = vmatpush1.msra.mxu0 0.0
      %378 = vmatprep.mubr.f32.mxu0 0.0
      %379 = vmatmul.mubr.f32.gmra.mrb[0].mxu0 %v214
      %v380 = vpop.f32.mrb[0].mxu0
      %v381 = vadd.f32 0.0, %v380
      %v382 = vpop.f32.mrb[0].mxu0
      %383 = vmatprep.mubr.f32.mxu0 0.0
      %384 = vmatmul.mubr.f32.gmra.mrb[0].mxu0 %v217
      %v385 = vpop.f32.mrb[0].mxu0
      %v386 = vadd.f32 0.0, %v385
      %v387 = vpop.f32.mrb[0].mxu0
      %388 = vmatprep.mubr.f32.mxu0 0.0
      %389 = vmatmul.mubr.f32.gmra.mrb[0].mxu0 %v220
      %v390 = vpop.f32.mrb[0].mxu0
      %v391 = vadd.f32 0.0, %v390
      %v392 = vpop.f32.mrb[0].mxu0
      %393 = vmatprep.mubr.f32.mxu0 0.0
      %394 = vmatmul.mubr.f32.gmra.mrb[0].mxu0 %v223
      %v395 = vpop.f32.mrb[0].mxu0
      %v396 = vadd.f32 0.0, %v395
      %v397 = vpop.f32.mrb[0].mxu0
      %398 = vdwg.mxu0
      %v400 = vsel %vm212, %v184, 0
      %v403 = vsel %vm212, %v185, 0
      %v406 = vsel %vm212, %v186, 0
      %v409 = vsel %vm212, %v187, 0
      %411 = vmatprep.subr.mxu0 %v181
      %412 = vmatpush1.msra.mxu0 %v180
      %413 = vmatprep.subr.mxu0 0.0
      %414 = vmatpush1.msra.mxu0 0.0
      %415 = vmatprep.subr.mxu0 0.0
      %416 = vmatpush1.msra.mxu0 0.0
      %417 = vmatprep.subr.mxu0 0.0
      %418 = vmatpush1.msra.mxu0 0.0
      %419 = vmatprep.subr.mxu0 0.0
      %420 = vmatpush1.msra.mxu0 0.0
      %421 = vmatprep.subr.mxu0 0.0
      %422 = vmatpush1.msra.mxu0 0.0
      %423 = vmatprep.subr.mxu0 0.0
      %424 = vmatpush1.msra.mxu0 0.0
      %425 = vmatprep.subr.mxu0 0.0
      %426 = vmatpush1.msra.mxu0 0.0
      %427 = vmatprep.subr.mxu0 0.0
      %428 = vmatpush1.msra.mxu0 0.0
      %429 = vmatprep.subr.mxu0 0.0
      %430 = vmatpush1.msra.mxu0 0.0
      %431 = vmatprep.subr.mxu0 0.0
      %432 = vmatpush1.msra.mxu0 0.0
      %433 = vmatprep.subr.mxu0 0.0
      %434 = vmatpush1.msra.mxu0 0.0
      %435 = vmatprep.subr.mxu0 0.0
      %436 = vmatpush1.msra.mxu0 0.0
      %437 = vmatprep.subr.mxu0 0.0
      %438 = vmatpush1.msra.mxu0 0.0
      %439 = vmatprep.subr.mxu0 0.0
      %440 = vmatpush1.msra.mxu0 0.0
      %441 = vmatprep.subr.mxu0 0.0
      %442 = vmatpush1.msra.mxu0 0.0
      %443 = vmatprep.subr.mxu0 0.0
      %444 = vmatpush1.msra.mxu0 0.0
      %445 = vmatprep.subr.mxu0 0.0
      %446 = vmatpush1.msra.mxu0 0.0
      %447 = vmatprep.subr.mxu0 0.0
      %448 = vmatpush1.msra.mxu0 0.0
      %449 = vmatprep.subr.mxu0 0.0
      %450 = vmatpush1.msra.mxu0 0.0
      %451 = vmatprep.subr.mxu0 0.0
      %452 = vmatpush1.msra.mxu0 0.0
      %453 = vmatprep.subr.mxu0 0.0
      %454 = vmatpush1.msra.mxu0 0.0
      %455 = vmatprep.subr.mxu0 0.0
      %456 = vmatpush1.msra.mxu0 0.0
      %457 = vmatprep.subr.mxu0 0.0
      %458 = vmatpush1.msra.mxu0 0.0
      %459 = vmatprep.subr.mxu0 0.0
      %460 = vmatpush1.msra.mxu0 0.0
      %461 = vmatprep.subr.mxu0 0.0
      %462 = vmatpush1.msra.mxu0 0.0
      %463 = vmatprep.subr.mxu0 0.0
      %464 = vmatpush1.msra.mxu0 0.0
      %465 = vmatprep.subr.mxu0 0.0
      %466 = vmatpush1.msra.mxu0 0.0
      %467 = vmatprep.subr.mxu0 0.0
      %468 = vmatpush1.msra.mxu0 0.0
      %469 = vmatprep.subr.mxu0 0.0
      %470 = vmatpush1.msra.mxu0 0.0
      %471 = vmatprep.subr.mxu0 0.0
      %472 = vmatpush1.msra.mxu0 0.0
      %473 = vmatprep.subr.mxu0 0.0
      %474 = vmatpush1.msra.mxu0 0.0
      %475 = vmatprep.mubr.f32.mxu0 0.0
      %476 = vmatmul.mubr.f32.gmra.mrb[0].mxu0 %v400
      %v477 = vpop.f32.mrb[0].mxu0
      %v478 = vadd.f32 %v292, %v477
      %v479 = vpop.f32.mrb[0].mxu0
      %v480 = vadd.f32 %v294, %v479
      %481 = vmatprep.mubr.f32.mxu0 0.0
      %482 = vmatmul.mubr.f32.gmra.mrb[0].mxu0 %v403
      %v483 = vpop.f32.mrb[0].mxu0
      %v484 = vadd.f32 %v298, %v483
      %v485 = vpop.f32.mrb[0].mxu0
      %v486 = vadd.f32 %v300, %v485
      %487 = vmatprep.mubr.f32.mxu0 0.0
      %488 = vmatmul.mubr.f32.gmra.mrb[0].mxu0 %v406
      %v489 = vpop.f32.mrb[0].mxu0
      %v490 = vadd.f32 %v304, %v489
      %v491 = vpop.f32.mrb[0].mxu0
      %v492 = vadd.f32 %v306, %v491
      %493 = vmatprep.mubr.f32.mxu0 0.0
      %494 = vmatmul.mubr.f32.gmra.mrb[0].mxu0 %v409
      %v495 = vpop.f32.mrb[0].mxu0
      %v496 = vadd.f32 %v310, %v495
      %v497 = vpop.f32.mrb[0].mxu0
      %v498 = vadd.f32 %v312, %v497
      %499 = vdwg.mxu0
      %500 = vmatprep.subr.mxu0 0.0
      %501 = vmatpush1.msra.mxu0 %v182
      %502 = vmatprep.subr.mxu0 0.0
      %503 = vmatpush1.msra.mxu0 0.0
      %504 = vmatprep.subr.mxu0 0.0
      %505 = vmatpush1.msra.mxu0 0.0
      %506 = vmatprep.subr.mxu0 0.0
      %507 = vmatpush1.msra.mxu0 0.0
      %508 = vmatprep.subr.mxu0 0.0
      %509 = vmatpush1.msra.mxu0 0.0
      %510 = vmatprep.subr.mxu0 0.0
      %511 = vmatpush1.msra.mxu0 0.0
      %512 = vmatprep.subr.mxu0 0.0
      %513 = vmatpush1.msra.mxu0 0.0
      %514 = vmatprep.subr.mxu0 0.0
      %515 = vmatpush1.msra.mxu0 0.0
      %516 = vmatprep.subr.mxu0 0.0
      %517 = vmatpush1.msra.mxu0 0.0
      %518 = vmatprep.subr.mxu0 0.0
      %519 = vmatpush1.msra.mxu0 0.0
      %520 = vmatprep.subr.mxu0 0.0
      %521 = vmatpush1.msra.mxu0 0.0
      %522 = vmatprep.subr.mxu0 0.0
      %523 = vmatpush1.msra.mxu0 0.0
      %524 = vmatprep.subr.mxu0 0.0
      %525 = vmatpush1.msra.mxu0 0.0
      %526 = vmatprep.subr.mxu0 0.0
      %527 = vmatpush1.msra.mxu0 0.0
      %528 = vmatprep.subr.mxu0 0.0
      %529 = vmatpush1.msra.mxu0 0.0
      %530 = vmatprep.subr.mxu0 0.0
      %531 = vmatpush1.msra.mxu0 0.0
      %532 = vmatprep.subr.mxu0 0.0
      %533 = vmatpush1.msra.mxu0 0.0
      %534 = vmatprep.subr.mxu0 0.0
      %535 = vmatpush1.msra.mxu0 0.0
      %536 = vmatprep.subr.mxu0 0.0
      %537 = vmatpush1.msra.mxu0 0.0
      %538 = vmatprep.subr.mxu0 0.0
      %539 = vmatpush1.msra.mxu0 0.0
      %540 = vmatprep.subr.mxu0 0.0
      %541 = vmatpush1.msra.mxu0 0.0
      %542 = vmatprep.subr.mxu0 0.0
      %543 = vmatpush1.msra.mxu0 0.0
      %544 = vmatprep.subr.mxu0 0.0
      %545 = vmatpush1.msra.mxu0 0.0
      %546 = vmatprep.subr.mxu0 0.0
      %547 = vmatpush1.msra.mxu0 0.0
      %548 = vmatprep.subr.mxu0 0.0
      %549 = vmatpush1.msra.mxu0 0.0
      %550 = vmatprep.subr.mxu0 0.0
      %551 = vmatpush1.msra.mxu0 0.0
      %552 = vmatprep.subr.mxu0 0.0
      %553 = vmatpush1.msra.mxu0 0.0
      %554 = vmatprep.subr.mxu0 0.0
      %555 = vmatpush1.msra.mxu0 0.0
      %556 = vmatprep.subr.mxu0 0.0
      %557 = vmatpush1.msra.mxu0 0.0
      %558 = vmatprep.subr.mxu0 0.0
      %559 = vmatpush1.msra.mxu0 0.0
      %560 = vmatprep.subr.mxu0 0.0
      %561 = vmatpush1.msra.mxu0 0.0
      %562 = vmatprep.subr.mxu0 0.0
      %563 = vmatpush1.msra.mxu0 0.0
      %564 = vmatprep.mubr.f32.mxu0 0.0
      %565 = vmatmul.mubr.f32.gmra.mrb[0].mxu0 %v400
      %v566 = vpop.f32.mrb[0].mxu0
      %v567 = vadd.f32 %v381, %v566
      %v568 = vpop.f32.mrb[0].mxu0
      %569 = vmatprep.mubr.f32.mxu0 0.0
      %570 = vmatmul.mubr.f32.gmra.mrb[0].mxu0 %v403
      %v571 = vpop.f32.mrb[0].mxu0
      %v572 = vadd.f32 %v386, %v571
      %v573 = vpop.f32.mrb[0].mxu0
      %574 = vmatprep.mubr.f32.mxu0 0.0
      %575 = vmatmul.mubr.f32.gmra.mrb[0].mxu0 %v406
      %v576 = vpop.f32.mrb[0].mxu0
      %v577 = vadd.f32 %v391, %v576
      %v578 = vpop.f32.mrb[0].mxu0
      %579 = vmatprep.mubr.f32.mxu0 0.0
      %580 = vmatmul.mubr.f32.gmra.mrb[0].mxu0 %v409
      %v581 = vpop.f32.mrb[0].mxu0
      %v582 = vadd.f32 %v396, %v581
      %v583 = vpop.f32.mrb[0].mxu0
      %584 = vdwg.mxu0
      %s585 = scalar_lea.vmem %s1, 64
      %v586 = vld [vmem:[%s585] sm:$0xff]
      %v587 = vld [vmem:[%s585 + $0x8] sm:$0xff]
      %v588 = vld [vmem:[%s585 + $0x10] sm:$0xff]
      %v589 = vld [vmem:[%s585 + $0x18] sm:$0xff]
      %590 = vrot.lane.b32.xlu0 %v180, 126
      %v591 = vpop.permute.xlu0 %590
      %592 = vrot.lane.b32.xlu0 %v181, 126
      %v593 = vpop.permute.xlu0 %592
      %594 = vrot.lane.b32.xlu0 %v182, 126
      %v595 = vpop.permute.xlu0 %594
      %596 = vrot.lane.b32.xlu0 %v183, 126
      %v597 = vpop.permute.xlu0 %596
      %vm598 = vcmask 1031168
      %v599 = vsel %vm598, %v591, %v593
      %v600 = vsel %vm598, %v593, %v595
      %v601 = vsel %vm598, %v595, %v597
      %v606 = vsel %vm212, %v586, 0
      %v609 = vsel %vm212, %v587, 0
      %v612 = vsel %vm212, %v588, 0
      %v615 = vsel %vm212, %v589, 0
      %617 = vmatprep.subr.mxu0 %v600
      %618 = vmatpush1.msra.mxu0 %v599
      %619 = vmatprep.subr.mxu0 0.0
      %620 = vmatpush1.msra.mxu0 0.0
      %621 = vmatprep.subr.mxu0 0.0
      %622 = vmatpush1.msra.mxu0 0.0
      %623 = vmatprep.subr.mxu0 0.0
      %624 = vmatpush1.msra.mxu0 0.0
      %625 = vmatprep.subr.mxu0 0.0
      %626 = vmatpush1.msra.mxu0 0.0
      %627 = vmatprep.subr.mxu0 0.0
      %628 = vmatpush1.msra.mxu0 0.0
      %629 = vmatprep.subr.mxu0 0.0
      %630 = vmatpush1.msra.mxu0 0.0
      %631 = vmatprep.subr.mxu0 0.0
      %632 = vmatpush1.msra.mxu0 0.0
      %633 = vmatprep.subr.mxu0 0.0
      %634 = vmatpush1.msra.mxu0 0.0
      %635 = vmatprep.subr.mxu0 0.0
      %636 = vmatpush1.msra.mxu0 0.0
      %637 = vmatprep.subr.mxu0 0.0
      %638 = vmatpush1.msra.mxu0 0.0
      %639 = vmatprep.subr.mxu0 0.0
      %640 = vmatpush1.msra.mxu0 0.0
      %641 = vmatprep.subr.mxu0 0.0
      %642 = vmatpush1.msra.mxu0 0.0
      %643 = vmatprep.subr.mxu0 0.0
      %644 = vmatpush1.msra.mxu0 0.0
      %645 = vmatprep.subr.mxu0 0.0
      %646 = vmatpush1.msra.mxu0 0.0
      %647 = vmatprep.subr.mxu0 0.0
      %648 = vmatpush1.msra.mxu0 0.0
      %649 = vmatprep.subr.mxu0 0.0
      %650 = vmatpush1.msra.mxu0 0.0
      %651 = vmatprep.subr.mxu0 0.0
      %652 = vmatpush1.msra.mxu0 0.0
      %653 = vmatprep.subr.mxu0 0.0
      %654 = vmatpush1.msra.mxu0 0.0
      %655 = vmatprep.subr.mxu0 0.0
      %656 = vmatpush1.msra.mxu0 0.0
      %657 = vmatprep.subr.mxu0 0.0
      %658 = vmatpush1.msra.mxu0 0.0
      %659 = vmatprep.subr.mxu0 0.0
      %660 = vmatpush1.msra.mxu0 0.0
      %661 = vmatprep.subr.mxu0 0.0
      %662 = vmatpush1.msra.mxu0 0.0
      %663 = vmatprep.subr.mxu0 0.0
      %664 = vmatpush1.msra.mxu0 0.0
      %665 = vmatprep.subr.mxu0 0.0
      %666 = vmatpush1.msra.mxu0 0.0
      %667 = vmatprep.subr.mxu0 0.0
      %668 = vmatpush1.msra.mxu0 0.0
      %669 = vmatprep.subr.mxu0 0.0
      %670 = vmatpush1.msra.mxu0 0.0
      %671 = vmatprep.subr.mxu0 0.0
      %672 = vmatpush1.msra.mxu0 0.0
      %673 = vmatprep.subr.mxu0 0.0
      %674 = vmatpush1.msra.mxu0 0.0
      %675 = vmatprep.subr.mxu0 0.0
      %676 = vmatpush1.msra.mxu0 0.0
      %677 = vmatprep.subr.mxu0 0.0
      %678 = vmatpush1.msra.mxu0 0.0
      %679 = vmatprep.subr.mxu0 0.0
      %680 = vmatpush1.msra.mxu0 0.0
      %681 = vmatprep.mubr.f32.mxu0 0.0
      %682 = vmatmul.mubr.f32.gmra.mrb[0].mxu0 %v606
      %v683 = vpop.f32.mrb[0].mxu0
      %v684 = vadd.f32 0.0, %v683
      %v685 = vpop.f32.mrb[0].mxu0
      %v686 = vadd.f32 0.0, %v685
      %687 = vmatprep.mubr.f32.mxu0 0.0
      %688 = vmatmul.mubr.f32.gmra.mrb[0].mxu0 %v609
      %v689 = vpop.f32.mrb[0].mxu0
      %v690 = vadd.f32 0.0, %v689
      %v691 = vpop.f32.mrb[0].mxu0
      %v692 = vadd.f32 0.0, %v691
      %693 = vmatprep.mubr.f32.mxu0 0.0
      %694 = vmatmul.mubr.f32.gmra.mrb[0].mxu0 %v612
      %v695 = vpop.f32.mrb[0].mxu0
      %v696 = vadd.f32 0.0, %v695
      %v697 = vpop.f32.mrb[0].mxu0
      %v698 = vadd.f32 0.0, %v697
      %699 = vmatprep.mubr.f32.mxu0 0.0
      %700 = vmatmul.mubr.f32.gmra.mrb[0].mxu0 %v615
      %v701 = vpop.f32.mrb[0].mxu0
      %v702 = vadd.f32 0.0, %v701
      %v703 = vpop.f32.mrb[0].mxu0
      %v704 = vadd.f32 0.0, %v703
      %705 = vdwg.mxu0
      %706 = vmatprep.subr.mxu0 0.0
      %707 = vmatpush1.msra.mxu0 %v601
      %708 = vmatprep.subr.mxu0 0.0
      %709 = vmatpush1.msra.mxu0 0.0
      %710 = vmatprep.subr.mxu0 0.0
      %711 = vmatpush1.msra.mxu0 0.0
      %712 = vmatprep.subr.mxu0 0.0
      %713 = vmatpush1.msra.mxu0 0.0
      %714 = vmatprep.subr.mxu0 0.0
      %715 = vmatpush1.msra.mxu0 0.0
      %716 = vmatprep.subr.mxu0 0.0
      %717 = vmatpush1.msra.mxu0 0.0
      %718 = vmatprep.subr.mxu0 0.0
      %719 = vmatpush1.msra.mxu0 0.0
      %720 = vmatprep.subr.mxu0 0.0
      %721 = vmatpush1.msra.mxu0 0.0
      %722 = vmatprep.subr.mxu0 0.0
      %723 = vmatpush1.msra.mxu0 0.0
      %724 = vmatprep.subr.mxu0 0.0
      %725 = vmatpush1.msra.mxu0 0.0
      %726 = vmatprep.subr.mxu0 0.0
      %727 = vmatpush1.msra.mxu0 0.0
      %728 = vmatprep.subr.mxu0 0.0
      %729 = vmatpush1.msra.mxu0 0.0
      %730 = vmatprep.subr.mxu0 0.0
      %731 = vmatpush1.msra.mxu0 0.0
      %732 = vmatprep.subr.mxu0 0.0
      %733 = vmatpush1.msra.mxu0 0.0
      %734 = vmatprep.subr.mxu0 0.0
      %735 = vmatpush1.msra.mxu0 0.0
      %736 = vmatprep.subr.mxu0 0.0
      %737 = vmatpush1.msra.mxu0 0.0
      %738 = vmatprep.subr.mxu0 0.0
      %739 = vmatpush1.msra.mxu0 0.0
      %740 = vmatprep.subr.mxu0 0.0
      %741 = vmatpush1.msra.mxu0 0.0
      %742 = vmatprep.subr.mxu0 0.0
      %743 = vmatpush1.msra.mxu0 0.0
      %744 = vmatprep.subr.mxu0 0.0
      %745 = vmatpush1.msra.mxu0 0.0
      %746 = vmatprep.subr.mxu0 0.0
      %747 = vmatpush1.msra.mxu0 0.0
      %748 = vmatprep.subr.mxu0 0.0
      %749 = vmatpush1.msra.mxu0 0.0
      %750 = vmatprep.subr.mxu0 0.0
      %751 = vmatpush1.msra.mxu0 0.0
      %752 = vmatprep.subr.mxu0 0.0
      %753 = vmatpush1.msra.mxu0 0.0
      %754 = vmatprep.subr.mxu0 0.0
      %755 = vmatpush1.msra.mxu0 0.0
      %756 = vmatprep.subr.mxu0 0.0
      %757 = vmatpush1.msra.mxu0 0.0
      %758 = vmatprep.subr.mxu0 0.0
      %759 = vmatpush1.msra.mxu0 0.0
      %760 = vmatprep.subr.mxu0 0.0
      %761 = vmatpush1.msra.mxu0 0.0
      %762 = vmatprep.subr.mxu0 0.0
      %763 = vmatpush1.msra.mxu0 0.0
      %764 = vmatprep.subr.mxu0 0.0
      %765 = vmatpush1.msra.mxu0 0.0
      %766 = vmatprep.subr.mxu0 0.0
      %767 = vmatpush1.msra.mxu0 0.0
      %768 = vmatprep.subr.mxu0 0.0
      %769 = vmatpush1.msra.mxu0 0.0
      %770 = vmatprep.mubr.f32.mxu0 0.0
      %771 = vmatmul.mubr.f32.gmra.mrb[0].mxu0 %v606
      %v772 = vpop.f32.mrb[0].mxu0
      %v773 = vadd.f32 0.0, %v772
      %v774 = vpop.f32.mrb[0].mxu0
      %775 = vmatprep.mubr.f32.mxu0 0.0
      %776 = vmatmul.mubr.f32.gmra.mrb[0].mxu0 %v609
      %v777 = vpop.f32.mrb[0].mxu0
      %v778 = vadd.f32 0.0, %v777
      %v779 = vpop.f32.mrb[0].mxu0
      %780 = vmatprep.mubr.f32.mxu0 0.0
      %781 = vmatmul.mubr.f32.gmra.mrb[0].mxu0 %v612
      %v782 = vpop.f32.mrb[0].mxu0
      %v783 = vadd.f32 0.0, %v782
      %v784 = vpop.f32.mrb[0].mxu0
      %785 = vmatprep.mubr.f32.mxu0 0.0
      %786 = vmatmul.mubr.f32.gmra.mrb[0].mxu0 %v615
      %v787 = vpop.f32.mrb[0].mxu0
      %v788 = vadd.f32 0.0, %v787
      %v789 = vpop.f32.mrb[0].mxu0
      %790 = vdwg.mxu0
      %v791 = vadd.f32 %v478, %v684
      %v792 = vadd.f32 %v480, %v686
      %v793 = vadd.f32 %v567, %v773
      %v794 = vadd.f32 %v484, %v690
      %v795 = vadd.f32 %v486, %v692
      %v796 = vadd.f32 %v572, %v778
      %v797 = vadd.f32 %v490, %v696
      %v798 = vadd.f32 %v492, %v698
      %v799 = vadd.f32 %v577, %v783
      %v800 = vadd.f32 %v496, %v702
      %v801 = vadd.f32 %v498, %v704
      %v802 = vadd.f32 %v582, %v788
      %s803 = scalar_lea.vmem %s1, 96
      %v804 = vld [vmem:[%s803] sm:$0xff]
      %v805 = vld [vmem:[%s803 + $0x8] sm:$0xff]
      %v806 = vld [vmem:[%s803 + $0x10] sm:$0xff]
      %v807 = vld [vmem:[%s803 + $0x18] sm:$0xff]
      %808 = vrot.lane.b32.xlu0 %v180, 104
      %v809 = vpop.permute.xlu0 %808
      %810 = vrot.lane.b32.xlu0 %v181, 104
      %v811 = vpop.permute.xlu0 %810
      %812 = vrot.lane.b32.xlu0 %v182, 104
      %v813 = vpop.permute.xlu0 %812
      %814 = vrot.lane.b32.xlu0 %v183, 104
      %v815 = vpop.permute.xlu0 %814
      %vm816 = vcmask 850944
      %v817 = vsel %vm816, %v809, %v811
      %v818 = vsel %vm816, %v811, %v813
      %v819 = vsel %vm816, %v813, %v815
      %v824 = vsel %vm212, %v804, 0
      %v827 = vsel %vm212, %v805, 0
      %v830 = vsel %vm212, %v806, 0
      %v833 = vsel %vm212, %v807, 0
      %835 = vmatprep.subr.mxu0 %v818
      %836 = vmatpush1.msra.mxu0 %v817
      %837 = vmatprep.subr.mxu0 0.0
      %838 = vmatpush1.msra.mxu0 0.0
      %839 = vmatprep.subr.mxu0 0.0
      %840 = vmatpush1.msra.mxu0 0.0
      %841 = vmatprep.subr.mxu0 0.0
      %842 = vmatpush1.msra.mxu0 0.0
      %843 = vmatprep.subr.mxu0 0.0
      %844 = vmatpush1.msra.mxu0 0.0
      %845 = vmatprep.subr.mxu0 0.0
      %846 = vmatpush1.msra.mxu0 0.0
      %847 = vmatprep.subr.mxu0 0.0
      %848 = vmatpush1.msra.mxu0 0.0
      %849 = vmatprep.subr.mxu0 0.0
      %850 = vmatpush1.msra.mxu0 0.0
      %851 = vmatprep.subr.mxu0 0.0
      %852 = vmatpush1.msra.mxu0 0.0
      %853 = vmatprep.subr.mxu0 0.0
      %854 = vmatpush1.msra.mxu0 0.0
      %855 = vmatprep.subr.mxu0 0.0
      %856 = vmatpush1.msra.mxu0 0.0
      %857 = vmatprep.subr.mxu0 0.0
      %858 = vmatpush1.msra.mxu0 0.0
      %859 = vmatprep.subr.mxu0 0.0
      %860 = vmatpush1.msra.mxu0 0.0
      %861 = vmatprep.subr.mxu0 0.0
      %862 = vmatpush1.msra.mxu0 0.0
      %863 = vmatprep.subr.mxu0 0.0
      %864 = vmatpush1.msra.mxu0 0.0
      %865 = vmatprep.subr.mxu0 0.0
      %866 = vmatpush1.msra.mxu0 0.0
      %867 = vmatprep.subr.mxu0 0.0
      %868 = vmatpush1.msra.mxu0 0.0
      %869 = vmatprep.subr.mxu0 0.0
      %870 = vmatpush1.msra.mxu0 0.0
      %871 = vmatprep.subr.mxu0 0.0
      %872 = vmatpush1.msra.mxu0 0.0
      %873 = vmatprep.subr.mxu0 0.0
      %874 = vmatpush1.msra.mxu0 0.0
      %875 = vmatprep.subr.mxu0 0.0
      %876 = vmatpush1.msra.mxu0 0.0
      %877 = vmatprep.subr.mxu0 0.0
      %878 = vmatpush1.msra.mxu0 0.0
      %879 = vmatprep.subr.mxu0 0.0
      %880 = vmatpush1.msra.mxu0 0.0
      %881 = vmatprep.subr.mxu0 0.0
      %882 = vmatpush1.msra.mxu0 0.0
      %883 = vmatprep.subr.mxu0 0.0
      %884 = vmatpush1.msra.mxu0 0.0
      %885 = vmatprep.subr.mxu0 0.0
      %886 = vmatpush1.msra.mxu0 0.0
      %887 = vmatprep.subr.mxu0 0.0
      %888 = vmatpush1.msra.mxu0 0.0
      %889 = vmatprep.subr.mxu0 0.0
      %890 = vmatpush1.msra.mxu0 0.0
      %891 = vmatprep.subr.mxu0 0.0
      %892 = vmatpush1.msra.mxu0 0.0
      %893 = vmatprep.subr.mxu0 0.0
      %894 = vmatpush1.msra.mxu0 0.0
      %895 = vmatprep.subr.mxu0 0.0
      %896 = vmatpush1.msra.mxu0 0.0
      %897 = vmatprep.subr.mxu0 0.0
      %898 = vmatpush1.msra.mxu0 0.0
      %899 = vmatprep.mubr.f32.mxu0 0.0
      %900 = vmatmul.mubr.f32.gmra.mrb[0].mxu0 %v824
      %v901 = vpop.f32.mrb[0].mxu0
      %v902 = vadd.f32 0.0, %v901
      %v903 = vpop.f32.mrb[0].mxu0
      %v904 = vadd.f32 0.0, %v903
      %905 = vmatprep.mubr.f32.mxu0 0.0
      %906 = vmatmul.mubr.f32.gmra.mrb[0].mxu0 %v827
      %v907 = vpop.f32.mrb[0].mxu0
      %v908 = vadd.f32 0.0, %v907
      %v909 = vpop.f32.mrb[0].mxu0
      %v910 = vadd.f32 0.0, %v909
      %911 = vmatprep.mubr.f32.mxu0 0.0
      %912 = vmatmul.mubr.f32.gmra.mrb[0].mxu0 %v830
      %v913 = vpop.f32.mrb[0].mxu0
      %v914 = vadd.f32 0.0, %v913
      %v915 = vpop.f32.mrb[0].mxu0
      %v916 = vadd.f32 0.0, %v915
      %917 = vmatprep.mubr.f32.mxu0 0.0
      %918 = vmatmul.mubr.f32.gmra.mrb[0].mxu0 %v833
      %v919 = vpop.f32.mrb[0].mxu0
      %v920 = vadd.f32 0.0, %v919
      %v921 = vpop.f32.mrb[0].mxu0
      %v922 = vadd.f32 0.0, %v921
      %923 = vdwg.mxu0
      %924 = vmatprep.subr.mxu0 0.0
      %925 = vmatpush1.msra.mxu0 %v819
      %926 = vmatprep.subr.mxu0 0.0
      %927 = vmatpush1.msra.mxu0 0.0
      %928 = vmatprep.subr.mxu0 0.0
      %929 = vmatpush1.msra.mxu0 0.0
      %930 = vmatprep.subr.mxu0 0.0
      %931 = vmatpush1.msra.mxu0 0.0
      %932 = vmatprep.subr.mxu0 0.0
      %933 = vmatpush1.msra.mxu0 0.0
      %934 = vmatprep.subr.mxu0 0.0
      %935 = vmatpush1.msra.mxu0 0.0
      %936 = vmatprep.subr.mxu0 0.0
      %937 = vmatpush1.msra.mxu0 0.0
      %938 = vmatprep.subr.mxu0 0.0
      %939 = vmatpush1.msra.mxu0 0.0
      %940 = vmatprep.subr.mxu0 0.0
      %941 = vmatpush1.msra.mxu0 0.0
      %942 = vmatprep.subr.mxu0 0.0
      %943 = vmatpush1.msra.mxu0 0.0
      %944 = vmatprep.subr.mxu0 0.0
      %945 = vmatpush1.msra.mxu0 0.0
      %946 = vmatprep.subr.mxu0 0.0
      %947 = vmatpush1.msra.mxu0 0.0
      %948 = vmatprep.subr.mxu0 0.0
      %949 = vmatpush1.msra.mxu0 0.0
      %950 = vmatprep.subr.mxu0 0.0
      %951 = vmatpush1.msra.mxu0 0.0
      %952 = vmatprep.subr.mxu0 0.0
      %953 = vmatpush1.msra.mxu0 0.0
      %954 = vmatprep.subr.mxu0 0.0
      %955 = vmatpush1.msra.mxu0 0.0
      %956 = vmatprep.subr.mxu0 0.0
      %957 = vmatpush1.msra.mxu0 0.0
      %958 = vmatprep.subr.mxu0 0.0
      %959 = vmatpush1.msra.mxu0 0.0
      %960 = vmatprep.subr.mxu0 0.0
      %961 = vmatpush1.msra.mxu0 0.0
      %962 = vmatprep.subr.mxu0 0.0
      %963 = vmatpush1.msra.mxu0 0.0
      %964 = vmatprep.subr.mxu0 0.0
      %965 = vmatpush1.msra.mxu0 0.0
      %966 = vmatprep.subr.mxu0 0.0
      %967 = vmatpush1.msra.mxu0 0.0
      %968 = vmatprep.subr.mxu0 0.0
      %969 = vmatpush1.msra.mxu0 0.0
      %970 = vmatprep.subr.mxu0 0.0
      %971 = vmatpush1.msra.mxu0 0.0
      %972 = vmatprep.subr.mxu0 0.0
      %973 = vmatpush1.msra.mxu0 0.0
      %974 = vmatprep.subr.mxu0 0.0
      %975 = vmatpush1.msra.mxu0 0.0
      %976 = vmatprep.subr.mxu0 0.0
      %977 = vmatpush1.msra.mxu0 0.0
      %978 = vmatprep.subr.mxu0 0.0
      %979 = vmatpush1.msra.mxu0 0.0
      %980 = vmatprep.subr.mxu0 0.0
      %981 = vmatpush1.msra.mxu0 0.0
      %982 = vmatprep.subr.mxu0 0.0
      %983 = vmatpush1.msra.mxu0 0.0
      %984 = vmatprep.subr.mxu0 0.0
      %985 = vmatpush1.msra.mxu0 0.0
      %986 = vmatprep.subr.mxu0 0.0
      %987 = vmatpush1.msra.mxu0 0.0
      %988 = vmatprep.mubr.f32.mxu0 0.0
      %989 = vmatmul.mubr.f32.gmra.mrb[0].mxu0 %v824
      %v990 = vpop.f32.mrb[0].mxu0
      %v991 = vadd.f32 0.0, %v990
      %v992 = vpop.f32.mrb[0].mxu0
      %993 = vmatprep.mubr.f32.mxu0 0.0
      %994 = vmatmul.mubr.f32.gmra.mrb[0].mxu0 %v827
      %v995 = vpop.f32.mrb[0].mxu0
      %v996 = vadd.f32 0.0, %v995
      %v997 = vpop.f32.mrb[0].mxu0
      %998 = vmatprep.mubr.f32.mxu0 0.0
      %999 = vmatmul.mubr.f32.gmra.mrb[0].mxu0 %v830
      %v1000 = vpop.f32.mrb[0].mxu0
      %v1001 = vadd.f32 0.0, %v1000
      %v1002 = vpop.f32.mrb[0].mxu0
      %1003 = vmatprep.mubr.f32.mxu0 0.0
      %1004 = vmatmul.mubr.f32.gmra.mrb[0].mxu0 %v833
      %v1005 = vpop.f32.mrb[0].mxu0
      %v1006 = vadd.f32 0.0, %v1005
      %v1007 = vpop.f32.mrb[0].mxu0
      %1008 = vdwg.mxu0
      %v1009 = vadd.f32 %v791, %v902
      %v1010 = vadd.f32 %v792, %v904
      %v1011 = vadd.f32 %v793, %v991
      %v1012 = vadd.f32 %v794, %v908
      %v1013 = vadd.f32 %v795, %v910
      %v1014 = vadd.f32 %v796, %v996
      %v1015 = vadd.f32 %v797, %v914
      %v1016 = vadd.f32 %v798, %v916
      %v1017 = vadd.f32 %v799, %v1001
      %v1018 = vadd.f32 %v800, %v920
      %v1019 = vadd.f32 %v801, %v922
      %v1020 = vadd.f32 %v802, %v1006
      %s1021 = scalar_lea.vmem %s1, 128
      %v1022 = vld [vmem:[%s1021] sm:$0xff]
      %v1023 = vld [vmem:[%s1021 + $0x8] sm:$0xff]
      %v1024 = vld [vmem:[%s1021 + $0x10] sm:$0xff]
      %v1025 = vld [vmem:[%s1021 + $0x18] sm:$0xff]
      %1026 = vrot.lane.b32.xlu0 %v180, 103
      %v1027 = vpop.permute.xlu0 %1026
      %1028 = vrot.lane.b32.xlu0 %v181, 103
      %v1029 = vpop.permute.xlu0 %1028
      %1030 = vrot.lane.b32.xlu0 %v182, 103
      %v1031 = vpop.permute.xlu0 %1030
      %1032 = vrot.lane.b32.xlu0 %v183, 103
      %v1033 = vpop.permute.xlu0 %1032
      %vm1034 = vcmask 842752
      %v1035 = vsel %vm1034, %v1027, %v1029
      %v1036 = vsel %vm1034, %v1029, %v1031
      %v1037 = vsel %vm1034, %v1031, %v1033
      %v1042 = vsel %vm212, %v1022, 0
      %v1045 = vsel %vm212, %v1023, 0
      %v1048 = vsel %vm212, %v1024, 0
      %v1051 = vsel %vm212, %v1025, 0
      %1053 = vmatprep.subr.mxu0 %v1036
      %1054 = vmatpush1.msra.mxu0 %v1035
      %1055 = vmatprep.subr.mxu0 0.0
      %1056 = vmatpush1.msra.mxu0 0.0
      %1057 = vmatprep.subr.mxu0 0.0
      %1058 = vmatpush1.msra.mxu0 0.0
      %1059 = vmatprep.subr.mxu0 0.0
      %1060 = vmatpush1.msra.mxu0 0.0
      %1061 = vmatprep.subr.mxu0 0.0
      %1062 = vmatpush1.msra.mxu0 0.0
      %1063 = vmatprep.subr.mxu0 0.0
      %1064 = vmatpush1.msra.mxu0 0.0
      %1065 = vmatprep.subr.mxu0 0.0
      %1066 = vmatpush1.msra.mxu0 0.0
      %1067 = vmatprep.subr.mxu0 0.0
      %1068 = vmatpush1.msra.mxu0 0.0
      %1069 = vmatprep.subr.mxu0 0.0
      %1070 = vmatpush1.msra.mxu0 0.0
      %1071 = vmatprep.subr.mxu0 0.0
      %1072 = vmatpush1.msra.mxu0 0.0
      %1073 = vmatprep.subr.mxu0 0.0
      %1074 = vmatpush1.msra.mxu0 0.0
      %1075 = vmatprep.subr.mxu0 0.0
      %1076 = vmatpush1.msra.mxu0 0.0
      %1077 = vmatprep.subr.mxu0 0.0
      %1078 = vmatpush1.msra.mxu0 0.0
      %1079 = vmatprep.subr.mxu0 0.0
      %1080 = vmatpush1.msra.mxu0 0.0
      %1081 = vmatprep.subr.mxu0 0.0
      %1082 = vmatpush1.msra.mxu0 0.0
      %1083 = vmatprep.subr.mxu0 0.0
      %1084 = vmatpush1.msra.mxu0 0.0
      %1085 = vmatprep.subr.mxu0 0.0
      %1086 = vmatpush1.msra.mxu0 0.0
      %1087 = vmatprep.subr.mxu0 0.0
      %1088 = vmatpush1.msra.mxu0 0.0
      %1089 = vmatprep.subr.mxu0 0.0
      %1090 = vmatpush1.msra.mxu0 0.0
      %1091 = vmatprep.subr.mxu0 0.0
      %1092 = vmatpush1.msra.mxu0 0.0
      %1093 = vmatprep.subr.mxu0 0.0
      %1094 = vmatpush1.msra.mxu0 0.0
      %1095 = vmatprep.subr.mxu0 0.0
      %1096 = vmatpush1.msra.mxu0 0.0
      %1097 = vmatprep.subr.mxu0 0.0
      %1098 = vmatpush1.msra.mxu0 0.0
      %1099 = vmatprep.subr.mxu0 0.0
      %1100 = vmatpush1.msra.mxu0 0.0
      %1101 = vmatprep.subr.mxu0 0.0
      %1102 = vmatpush1.msra.mxu0 0.0
      %1103 = vmatprep.subr.mxu0 0.0
      %1104 = vmatpush1.msra.mxu0 0.0
      %1105 = vmatprep.subr.mxu0 0.0
      %1106 = vmatpush1.msra.mxu0 0.0
      %1107 = vmatprep.subr.mxu0 0.0
      %1108 = vmatpush1.msra.mxu0 0.0
      %1109 = vmatprep.subr.mxu0 0.0
      %1110 = vmatpush1.msra.mxu0 0.0
      %1111 = vmatprep.subr.mxu0 0.0
      %1112 = vmatpush1.msra.mxu0 0.0
      %1113 = vmatprep.subr.mxu0 0.0
      %1114 = vmatpush1.msra.mxu0 0.0
      %1115 = vmatprep.subr.mxu0 0.0
      %1116 = vmatpush1.msra.mxu0 0.0
      %1117 = vmatprep.mubr.f32.mxu0 0.0
      %1118 = vmatmul.mubr.f32.gmra.mrb[0].mxu0 %v1042
      %v1119 = vpop.f32.mrb[0].mxu0
      %v1120 = vadd.f32 0.0, %v1119
      %v1121 = vpop.f32.mrb[0].mxu0
      %v1122 = vadd.f32 0.0, %v1121
      %1123 = vmatprep.mubr.f32.mxu0 0.0
      %1124 = vmatmul.mubr.f32.gmra.mrb[0].mxu0 %v1045
      %v1125 = vpop.f32.mrb[0].mxu0
      %v1126 = vadd.f32 0.0, %v1125
      %v1127 = vpop.f32.mrb[0].mxu0
      %v1128 = vadd.f32 0.0, %v1127
      %1129 = vmatprep.mubr.f32.mxu0 0.0
      %1130 = vmatmul.mubr.f32.gmra.mrb[0].mxu0 %v1048
      %v1131 = vpop.f32.mrb[0].mxu0
      %v1132 = vadd.f32 0.0, %v1131
      %v1133 = vpop.f32.mrb[0].mxu0
      %v1134 = vadd.f32 0.0, %v1133
      %1135 = vmatprep.mubr.f32.mxu0 0.0
      %1136 = vmatmul.mubr.f32.gmra.mrb[0].mxu0 %v1051
      %v1137 = vpop.f32.mrb[0].mxu0
      %v1138 = vadd.f32 0.0, %v1137
      %v1139 = vpop.f32.mrb[0].mxu0
      %v1140 = vadd.f32 0.0, %v1139
      %1141 = vdwg.mxu0
      %1142 = vmatprep.subr.mxu0 0.0
      %1143 = vmatpush1.msra.mxu0 %v1037
      %1144 = vmatprep.subr.mxu0 0.0
      %1145 = vmatpush1.msra.mxu0 0.0
      %1146 = vmatprep.subr.mxu0 0.0
      %1147 = vmatpush1.msra.mxu0 0.0
      %1148 = vmatprep.subr.mxu0 0.0
      %1149 = vmatpush1.msra.mxu0 0.0
      %1150 = vmatprep.subr.mxu0 0.0
      %1151 = vmatpush1.msra.mxu0 0.0
      %1152 = vmatprep.subr.mxu0 0.0
      %1153 = vmatpush1.msra.mxu0 0.0
      %1154 = vmatprep.subr.mxu0 0.0
      %1155 = vmatpush1.msra.mxu0 0.0
      %1156 = vmatprep.subr.mxu0 0.0
      %1157 = vmatpush1.msra.mxu0 0.0
      %1158 = vmatprep.subr.mxu0 0.0
      %1159 = vmatpush1.msra.mxu0 0.0
      %1160 = vmatprep.subr.mxu0 0.0
      %1161 = vmatpush1.msra.mxu0 0.0
      %1162 = vmatprep.subr.mxu0 0.0
      %1163 = vmatpush1.msra.mxu0 0.0
      %1164 = vmatprep.subr.mxu0 0.0
      %1165 = vmatpush1.msra.mxu0 0.0
      %1166 = vmatprep.subr.mxu0 0.0
      %1167 = vmatpush1.msra.mxu0 0.0
      %1168 = vmatprep.subr.mxu0 0.0
      %1169 = vmatpush1.msra.mxu0 0.0
      %1170 = vmatprep.subr.mxu0 0.0
      %1171 = vmatpush1.msra.mxu0 0.0
      %1172 = vmatprep.subr.mxu0 0.0
      %1173 = vmatpush1.msra.mxu0 0.0
      %1174 = vmatprep.subr.mxu0 0.0
      %1175 = vmatpush1.msra.mxu0 0.0
      %1176 = vmatprep.subr.mxu0 0.0
      %1177 = vmatpush1.msra.mxu0 0.0
      %1178 = vmatprep.subr.mxu0 0.0
      %1179 = vmatpush1.msra.mxu0 0.0
      %1180 = vmatprep.subr.mxu0 0.0
      %1181 = vmatpush1.msra.mxu0 0.0
      %1182 = vmatprep.subr.mxu0 0.0
      %1183 = vmatpush1.msra.mxu0 0.0
      %1184 = vmatprep.subr.mxu0 0.0
      %1185 = vmatpush1.msra.mxu0 0.0
      %1186 = vmatprep.subr.mxu0 0.0
      %1187 = vmatpush1.msra.mxu0 0.0
      %1188 = vmatprep.subr.mxu0 0.0
      %1189 = vmatpush1.msra.mxu0 0.0
      %1190 = vmatprep.subr.mxu0 0.0
      %1191 = vmatpush1.msra.mxu0 0.0
      %1192 = vmatprep.subr.mxu0 0.0
      %1193 = vmatpush1.msra.mxu0 0.0
      %1194 = vmatprep.subr.mxu0 0.0
      %1195 = vmatpush1.msra.mxu0 0.0
      %1196 = vmatprep.subr.mxu0 0.0
      %1197 = vmatpush1.msra.mxu0 0.0
      %1198 = vmatprep.subr.mxu0 0.0
      %1199 = vmatpush1.msra.mxu0 0.0
      %1200 = vmatprep.subr.mxu0 0.0
      %1201 = vmatpush1.msra.mxu0 0.0
      %1202 = vmatprep.subr.mxu0 0.0
      %1203 = vmatpush1.msra.mxu0 0.0
      %1204 = vmatprep.subr.mxu0 0.0
      %1205 = vmatpush1.msra.mxu0 0.0
      %1206 = vmatprep.mubr.f32.mxu0 0.0
      %1207 = vmatmul.mubr.f32.gmra.mrb[0].mxu0 %v1042
      %v1208 = vpop.f32.mrb[0].mxu0
      %v1209 = vadd.f32 0.0, %v1208
      %v1210 = vpop.f32.mrb[0].mxu0
      %1211 = vmatprep.mubr.f32.mxu0 0.0
      %1212 = vmatmul.mubr.f32.gmra.mrb[0].mxu0 %v1045
      %v1213 = vpop.f32.mrb[0].mxu0
      %v1214 = vadd.f32 0.0, %v1213
      %v1215 = vpop.f32.mrb[0].mxu0
      %1216 = vmatprep.mubr.f32.mxu0 0.0
      %1217 = vmatmul.mubr.f32.gmra.mrb[0].mxu0 %v1048
      %v1218 = vpop.f32.mrb[0].mxu0
      %v1219 = vadd.f32 0.0, %v1218
      %v1220 = vpop.f32.mrb[0].mxu0
      %1221 = vmatprep.mubr.f32.mxu0 0.0
      %1222 = vmatmul.mubr.f32.gmra.mrb[0].mxu0 %v1051
      %v1223 = vpop.f32.mrb[0].mxu0
      %v1224 = vadd.f32 0.0, %v1223
      %v1225 = vpop.f32.mrb[0].mxu0
      %1226 = vdwg.mxu0
      %v1227 = vadd.f32 %v1009, %v1120
      %v1228 = vadd.f32 %v1010, %v1122
      %v1229 = vadd.f32 %v1011, %v1209
      %v1230 = vadd.f32 %v1012, %v1126
      %v1231 = vadd.f32 %v1013, %v1128
      %v1232 = vadd.f32 %v1014, %v1214
      %v1233 = vadd.f32 %v1015, %v1132
      %v1234 = vadd.f32 %v1016, %v1134
      %v1235 = vadd.f32 %v1017, %v1219
      %v1236 = vadd.f32 %v1018, %v1138
      %v1237 = vadd.f32 %v1019, %v1140
      %v1238 = vadd.f32 %v1020, %v1224
      %s1239 = scalar_lea.vmem %s1, 160
      %v1240 = vld [vmem:[%s1239] sm:$0xff]
      %v1241 = vld [vmem:[%s1239 + $0x8] sm:$0xff]
      %v1242 = vld [vmem:[%s1239 + $0x10] sm:$0xff]
      %v1243 = vld [vmem:[%s1239 + $0x18] sm:$0xff]
      %1244 = vrot.lane.b32.xlu0 %v180, 102
      %v1245 = vpop.permute.xlu0 %1244
      %1246 = vrot.lane.b32.xlu0 %v181, 102
      %v1247 = vpop.permute.xlu0 %1246
      %1248 = vrot.lane.b32.xlu0 %v182, 102
      %v1249 = vpop.permute.xlu0 %1248
      %1250 = vrot.lane.b32.xlu0 %v183, 102
      %v1251 = vpop.permute.xlu0 %1250
      %vm1252 = vcmask 834560
      %v1253 = vsel %vm1252, %v1245, %v1247
      %v1254 = vsel %vm1252, %v1247, %v1249
      %v1255 = vsel %vm1252, %v1249, %v1251
      %v1260 = vsel %vm212, %v1240, 0
      %v1263 = vsel %vm212, %v1241, 0
      %v1266 = vsel %vm212, %v1242, 0
      %v1269 = vsel %vm212, %v1243, 0
      %1271 = vmatprep.subr.mxu0 %v1254
      %1272 = vmatpush1.msra.mxu0 %v1253
      %1273 = vmatprep.subr.mxu0 0.0
      %1274 = vmatpush1.msra.mxu0 0.0
      %1275 = vmatprep.subr.mxu0 0.0
      %1276 = vmatpush1.msra.mxu0 0.0
      %1277 = vmatprep.subr.mxu0 0.0
      %1278 = vmatpush1.msra.mxu0 0.0
      %1279 = vmatprep.subr.mxu0 0.0
      %1280 = vmatpush1.msra.mxu0 0.0
      %1281 = vmatprep.subr.mxu0 0.0
      %1282 = vmatpush1.msra.mxu0 0.0
      %1283 = vmatprep.subr.mxu0 0.0
      %1284 = vmatpush1.msra.mxu0 0.0
      %1285 = vmatprep.subr.mxu0 0.0
      %1286 = vmatpush1.msra.mxu0 0.0
      %1287 = vmatprep.subr.mxu0 0.0
      %1288 = vmatpush1.msra.mxu0 0.0
      %1289 = vmatprep.subr.mxu0 0.0
      %1290 = vmatpush1.msra.mxu0 0.0
      %1291 = vmatprep.subr.mxu0 0.0
      %1292 = vmatpush1.msra.mxu0 0.0
      %1293 = vmatprep.subr.mxu0 0.0
      %1294 = vmatpush1.msra.mxu0 0.0
      %1295 = vmatprep.subr.mxu0 0.0
      %1296 = vmatpush1.msra.mxu0 0.0
      %1297 = vmatprep.subr.mxu0 0.0
      %1298 = vmatpush1.msra.mxu0 0.0
      %1299 = vmatprep.subr.mxu0 0.0
      %1300 = vmatpush1.msra.mxu0 0.0
      %1301 = vmatprep.subr.mxu0 0.0
      %1302 = vmatpush1.msra.mxu0 0.0
      %1303 = vmatprep.subr.mxu0 0.0
      %1304 = vmatpush1.msra.mxu0 0.0
      %1305 = vmatprep.subr.mxu0 0.0
      %1306 = vmatpush1.msra.mxu0 0.0
      %1307 = vmatprep.subr.mxu0 0.0
      %1308 = vmatpush1.msra.mxu0 0.0
      %1309 = vmatprep.subr.mxu0 0.0
      %1310 = vmatpush1.msra.mxu0 0.0
      %1311 = vmatprep.subr.mxu0 0.0
      %1312 = vmatpush1.msra.mxu0 0.0
      %1313 = vmatprep.subr.mxu0 0.0
      %1314 = vmatpush1.msra.mxu0 0.0
      %1315 = vmatprep.subr.mxu0 0.0
      %1316 = vmatpush1.msra.mxu0 0.0
      %1317 = vmatprep.subr.mxu0 0.0
      %1318 = vmatpush1.msra.mxu0 0.0
      %1319 = vmatprep.subr.mxu0 0.0
      %1320 = vmatpush1.msra.mxu0 0.0
      %1321 = vmatprep.subr.mxu0 0.0
      %1322 = vmatpush1.msra.mxu0 0.0
      %1323 = vmatprep.subr.mxu0 0.0
      %1324 = vmatpush1.msra.mxu0 0.0
      %1325 = vmatprep.subr.mxu0 0.0
      %1326 = vmatpush1.msra.mxu0 0.0
      %1327 = vmatprep.subr.mxu0 0.0
      %1328 = vmatpush1.msra.mxu0 0.0
      %1329 = vmatprep.subr.mxu0 0.0
      %1330 = vmatpush1.msra.mxu0 0.0
      %1331 = vmatprep.subr.mxu0 0.0
      %1332 = vmatpush1.msra.mxu0 0.0
      %1333 = vmatprep.subr.mxu0 0.0
      %1334 = vmatpush1.msra.mxu0 0.0
      %1335 = vmatprep.mubr.f32.mxu0 0.0
      %1336 = vmatmul.mubr.f32.gmra.mrb[0].mxu0 %v1260
      %v1337 = vpop.f32.mrb[0].mxu0
      %v1338 = vadd.f32 0.0, %v1337
      %v1339 = vpop.f32.mrb[0].mxu0
      %v1340 = vadd.f32 0.0, %v1339
      %1341 = vmatprep.mubr.f32.mxu0 0.0
      %1342 = vmatmul.mubr.f32.gmra.mrb[0].mxu0 %v1263
      %v1343 = vpop.f32.mrb[0].mxu0
      %v1344 = vadd.f32 0.0, %v1343
      %v1345 = vpop.f32.mrb[0].mxu0
      %v1346 = vadd.f32 0.0, %v1345
      %1347 = vmatprep.mubr.f32.mxu0 0.0
      %1348 = vmatmul.mubr.f32.gmra.mrb[0].mxu0 %v1266
      %v1349 = vpop.f32.mrb[0].mxu0
      %v1350 = vadd.f32 0.0, %v1349
      %v1351 = vpop.f32.mrb[0].mxu0
      %v1352 = vadd.f32 0.0, %v1351
      %1353 = vmatprep.mubr.f32.mxu0 0.0
      %1354 = vmatmul.mubr.f32.gmra.mrb[0].mxu0 %v1269
      %v1355 = vpop.f32.mrb[0].mxu0
      %v1356 = vadd.f32 0.0, %v1355
      %v1357 = vpop.f32.mrb[0].mxu0
      %v1358 = vadd.f32 0.0, %v1357
      %1359 = vdwg.mxu0
      %1360 = vmatprep.subr.mxu0 0.0
      %1361 = vmatpush1.msra.mxu0 %v1255
      %1362 = vmatprep.subr.mxu0 0.0
      %1363 = vmatpush1.msra.mxu0 0.0
      %1364 = vmatprep.subr.mxu0 0.0
      %1365 = vmatpush1.msra.mxu0 0.0
      %1366 = vmatprep.subr.mxu0 0.0
      %1367 = vmatpush1.msra.mxu0 0.0
      %1368 = vmatprep.subr.mxu0 0.0
      %1369 = vmatpush1.msra.mxu0 0.0
      %1370 = vmatprep.subr.mxu0 0.0
      %1371 = vmatpush1.msra.mxu0 0.0
      %1372 = vmatprep.subr.mxu0 0.0
      %1373 = vmatpush1.msra.mxu0 0.0
      %1374 = vmatprep.subr.mxu0 0.0
      %1375 = vmatpush1.msra.mxu0 0.0
      %1376 = vmatprep.subr.mxu0 0.0
      %1377 = vmatpush1.msra.mxu0 0.0
      %1378 = vmatprep.subr.mxu0 0.0
      %1379 = vmatpush1.msra.mxu0 0.0
      %1380 = vmatprep.subr.mxu0 0.0
      %1381 = vmatpush1.msra.mxu0 0.0
      %1382 = vmatprep.subr.mxu0 0.0
      %1383 = vmatpush1.msra.mxu0 0.0
      %1384 = vmatprep.subr.mxu0 0.0
      %1385 = vmatpush1.msra.mxu0 0.0
      %1386 = vmatprep.subr.mxu0 0.0
      %1387 = vmatpush1.msra.mxu0 0.0
      %1388 = vmatprep.subr.mxu0 0.0
      %1389 = vmatpush1.msra.mxu0 0.0
      %1390 = vmatprep.subr.mxu0 0.0
      %1391 = vmatpush1.msra.mxu0 0.0
      %1392 = vmatprep.subr.mxu0 0.0
      %1393 = vmatpush1.msra.mxu0 0.0
      %1394 = vmatprep.subr.mxu0 0.0
      %1395 = vmatpush1.msra.mxu0 0.0
      %1396 = vmatprep.subr.mxu0 0.0
      %1397 = vmatpush1.msra.mxu0 0.0
      %1398 = vmatprep.subr.mxu0 0.0
      %1399 = vmatpush1.msra.mxu0 0.0
      %1400 = vmatprep.subr.mxu0 0.0
      %1401 = vmatpush1.msra.mxu0 0.0
      %1402 = vmatprep.subr.mxu0 0.0
      %1403 = vmatpush1.msra.mxu0 0.0
      %1404 = vmatprep.subr.mxu0 0.0
      %1405 = vmatpush1.msra.mxu0 0.0
      %1406 = vmatprep.subr.mxu0 0.0
      %1407 = vmatpush1.msra.mxu0 0.0
      %1408 = vmatprep.subr.mxu0 0.0
      %1409 = vmatpush1.msra.mxu0 0.0
      %1410 = vmatprep.subr.mxu0 0.0
      %1411 = vmatpush1.msra.mxu0 0.0
      %1412 = vmatprep.subr.mxu0 0.0
      %1413 = vmatpush1.msra.mxu0 0.0
      %1414 = vmatprep.subr.mxu0 0.0
      %1415 = vmatpush1.msra.mxu0 0.0
      %1416 = vmatprep.subr.mxu0 0.0
      %1417 = vmatpush1.msra.mxu0 0.0
      %1418 = vmatprep.subr.mxu0 0.0
      %1419 = vmatpush1.msra.mxu0 0.0
      %1420 = vmatprep.subr.mxu0 0.0
      %1421 = vmatpush1.msra.mxu0 0.0
      %1422 = vmatprep.subr.mxu0 0.0
      %1423 = vmatpush1.msra.mxu0 0.0
      %1424 = vmatprep.mubr.f32.mxu0 0.0
      %1425 = vmatmul.mubr.f32.gmra.mrb[0].mxu0 %v1260
      %v1426 = vpop.f32.mrb[0].mxu0
      %v1427 = vadd.f32 0.0, %v1426
      %v1428 = vpop.f32.mrb[0].mxu0
      %1429 = vmatprep.mubr.f32.mxu0 0.0
      %1430 = vmatmul.mubr.f32.gmra.mrb[0].mxu0 %v1263
      %v1431 = vpop.f32.mrb[0].mxu0
      %v1432 = vadd.f32 0.0, %v1431
      %v1433 = vpop.f32.mrb[0].mxu0
      %1434 = vmatprep.mubr.f32.mxu0 0.0
      %1435 = vmatmul.mubr.f32.gmra.mrb[0].mxu0 %v1266
      %v1436 = vpop.f32.mrb[0].mxu0
      %v1437 = vadd.f32 0.0, %v1436
      %v1438 = vpop.f32.mrb[0].mxu0
      %1439 = vmatprep.mubr.f32.mxu0 0.0
      %1440 = vmatmul.mubr.f32.gmra.mrb[0].mxu0 %v1269
      %v1441 = vpop.f32.mrb[0].mxu0
      %v1442 = vadd.f32 0.0, %v1441
      %v1443 = vpop.f32.mrb[0].mxu0
      %1444 = vdwg.mxu0
      %v1445 = vadd.f32 %v1227, %v1338
      %v1446 = vadd.f32 %v1228, %v1340
      %v1447 = vadd.f32 %v1229, %v1427
      %v1448 = vadd.f32 %v1230, %v1344
      %v1449 = vadd.f32 %v1231, %v1346
      %v1450 = vadd.f32 %v1232, %v1432
      %v1451 = vadd.f32 %v1233, %v1350
      %v1452 = vadd.f32 %v1234, %v1352
      %v1453 = vadd.f32 %v1235, %v1437
      %v1454 = vadd.f32 %v1236, %v1356
      %v1455 = vadd.f32 %v1237, %v1358
      %v1456 = vadd.f32 %v1238, %v1442
      %s1457 = scalar_lea.vmem %s1, 192
      %v1458 = vld [vmem:[%s1457] sm:$0xff]
      %v1459 = vld [vmem:[%s1457 + $0x8] sm:$0xff]
      %v1460 = vld [vmem:[%s1457 + $0x10] sm:$0xff]
      %v1461 = vld [vmem:[%s1457 + $0x18] sm:$0xff]
      %1462 = vrot.lane.b32.xlu0 %v180, 80
      %v1463 = vpop.permute.xlu0 %1462
      %1464 = vrot.lane.b32.xlu0 %v181, 80
      %v1465 = vpop.permute.xlu0 %1464
      %1466 = vrot.lane.b32.xlu0 %v182, 80
      %v1467 = vpop.permute.xlu0 %1466
      %1468 = vrot.lane.b32.xlu0 %v183, 80
      %v1469 = vpop.permute.xlu0 %1468
      %vm1470 = vcmask 654336
      %v1471 = vsel %vm1470, %v1463, %v1465
      %v1472 = vsel %vm1470, %v1465, %v1467
      %v1473 = vsel %vm1470, %v1467, %v1469
      %v1478 = vsel %vm212, %v1458, 0
      %v1481 = vsel %vm212, %v1459, 0
      %v1484 = vsel %vm212, %v1460, 0
      %v1487 = vsel %vm212, %v1461, 0
      %1489 = vmatprep.subr.mxu0 %v1472
      %1490 = vmatpush1.msra.mxu0 %v1471
      %1491 = vmatprep.subr.mxu0 0.0
      %1492 = vmatpush1.msra.mxu0 0.0
      %1493 = vmatprep.subr.mxu0 0.0
      %1494 = vmatpush1.msra.mxu0 0.0
      %1495 = vmatprep.subr.mxu0 0.0
      %1496 = vmatpush1.msra.mxu0 0.0
      %1497 = vmatprep.subr.mxu0 0.0
      %1498 = vmatpush1.msra.mxu0 0.0
      %1499 = vmatprep.subr.mxu0 0.0
      %1500 = vmatpush1.msra.mxu0 0.0
      %1501 = vmatprep.subr.mxu0 0.0
      %1502 = vmatpush1.msra.mxu0 0.0
      %1503 = vmatprep.subr.mxu0 0.0
      %1504 = vmatpush1.msra.mxu0 0.0
      %1505 = vmatprep.subr.mxu0 0.0
      %1506 = vmatpush1.msra.mxu0 0.0
      %1507 = vmatprep.subr.mxu0 0.0
      %1508 = vmatpush1.msra.mxu0 0.0
      %1509 = vmatprep.subr.mxu0 0.0
      %1510 = vmatpush1.msra.mxu0 0.0
      %1511 = vmatprep.subr.mxu0 0.0
      %1512 = vmatpush1.msra.mxu0 0.0
      %1513 = vmatprep.subr.mxu0 0.0
      %1514 = vmatpush1.msra.mxu0 0.0
      %1515 = vmatprep.subr.mxu0 0.0
      %1516 = vmatpush1.msra.mxu0 0.0
      %1517 = vmatprep.subr.mxu0 0.0
      %1518 = vmatpush1.msra.mxu0 0.0
      %1519 = vmatprep.subr.mxu0 0.0
      %1520 = vmatpush1.msra.mxu0 0.0
      %1521 = vmatprep.subr.mxu0 0.0
      %1522 = vmatpush1.msra.mxu0 0.0
      %1523 = vmatprep.subr.mxu0 0.0
      %1524 = vmatpush1.msra.mxu0 0.0
      %1525 = vmatprep.subr.mxu0 0.0
      %1526 = vmatpush1.msra.mxu0 0.0
      %1527 = vmatprep.subr.mxu0 0.0
      %1528 = vmatpush1.msra.mxu0 0.0
      %1529 = vmatprep.subr.mxu0 0.0
      %1530 = vmatpush1.msra.mxu0 0.0
      %1531 = vmatprep.subr.mxu0 0.0
      %1532 = vmatpush1.msra.mxu0 0.0
      %1533 = vmatprep.subr.mxu0 0.0
      %1534 = vmatpush1.msra.mxu0 0.0
      %1535 = vmatprep.subr.mxu0 0.0
      %1536 = vmatpush1.msra.mxu0 0.0
      %1537 = vmatprep.subr.mxu0 0.0
      %1538 = vmatpush1.msra.mxu0 0.0
      %1539 = vmatprep.subr.mxu0 0.0
      %1540 = vmatpush1.msra.mxu0 0.0
      %1541 = vmatprep.subr.mxu0 0.0
      %1542 = vmatpush1.msra.mxu0 0.0
      %1543 = vmatprep.subr.mxu0 0.0
      %1544 = vmatpush1.msra.mxu0 0.0
      %1545 = vmatprep.subr.mxu0 0.0
      %1546 = vmatpush1.msra.mxu0 0.0
      %1547 = vmatprep.subr.mxu0 0.0
      %1548 = vmatpush1.msra.mxu0 0.0
      %1549 = vmatprep.subr.mxu0 0.0
      %1550 = vmatpush1.msra.mxu0 0.0
      %1551 = vmatprep.subr.mxu0 0.0
      %1552 = vmatpush1.msra.mxu0 0.0
      %1553 = vmatprep.mubr.f32.mxu0 0.0
      %1554 = vmatmul.mubr.f32.gmra.mrb[0].mxu0 %v1478
      %v1555 = vpop.f32.mrb[0].mxu0
      %v1556 = vadd.f32 0.0, %v1555
      %v1557 = vpop.f32.mrb[0].mxu0
      %v1558 = vadd.f32 0.0, %v1557
      %1559 = vmatprep.mubr.f32.mxu0 0.0
      %1560 = vmatmul.mubr.f32.gmra.mrb[0].mxu0 %v1481
      %v1561 = vpop.f32.mrb[0].mxu0
      %v1562 = vadd.f32 0.0, %v1561
      %v1563 = vpop.f32.mrb[0].mxu0
      %v1564 = vadd.f32 0.0, %v1563
      %1565 = vmatprep.mubr.f32.mxu0 0.0
      %1566 = vmatmul.mubr.f32.gmra.mrb[0].mxu0 %v1484
      %v1567 = vpop.f32.mrb[0].mxu0
      %v1568 = vadd.f32 0.0, %v1567
      %v1569 = vpop.f32.mrb[0].mxu0
      %v1570 = vadd.f32 0.0, %v1569
      %1571 = vmatprep.mubr.f32.mxu0 0.0
      %1572 = vmatmul.mubr.f32.gmra.mrb[0].mxu0 %v1487
      %v1573 = vpop.f32.mrb[0].mxu0
      %v1574 = vadd.f32 0.0, %v1573
      %v1575 = vpop.f32.mrb[0].mxu0
      %v1576 = vadd.f32 0.0, %v1575
      %1577 = vdwg.mxu0
      %1578 = vmatprep.subr.mxu0 0.0
      %1579 = vmatpush1.msra.mxu0 %v1473
      %1580 = vmatprep.subr.mxu0 0.0
      %1581 = vmatpush1.msra.mxu0 0.0
      %1582 = vmatprep.subr.mxu0 0.0
      %1583 = vmatpush1.msra.mxu0 0.0
      %1584 = vmatprep.subr.mxu0 0.0
      %1585 = vmatpush1.msra.mxu0 0.0
      %1586 = vmatprep.subr.mxu0 0.0
      %1587 = vmatpush1.msra.mxu0 0.0
      %1588 = vmatprep.subr.mxu0 0.0
      %1589 = vmatpush1.msra.mxu0 0.0
      %1590 = vmatprep.subr.mxu0 0.0
      %1591 = vmatpush1.msra.mxu0 0.0
      %1592 = vmatprep.subr.mxu0 0.0
      %1593 = vmatpush1.msra.mxu0 0.0
      %1594 = vmatprep.subr.mxu0 0.0
      %1595 = vmatpush1.msra.mxu0 0.0
      %1596 = vmatprep.subr.mxu0 0.0
      %1597 = vmatpush1.msra.mxu0 0.0
      %1598 = vmatprep.subr.mxu0 0.0
      %1599 = vmatpush1.msra.mxu0 0.0
      %1600 = vmatprep.subr.mxu0 0.0
      %1601 = vmatpush1.msra.mxu0 0.0
      %1602 = vmatprep.subr.mxu0 0.0
      %1603 = vmatpush1.msra.mxu0 0.0
      %1604 = vmatprep.subr.mxu0 0.0
      %1605 = vmatpush1.msra.mxu0 0.0
      %1606 = vmatprep.subr.mxu0 0.0
      %1607 = vmatpush1.msra.mxu0 0.0
      %1608 = vmatprep.subr.mxu0 0.0
      %1609 = vmatpush1.msra.mxu0 0.0
      %1610 = vmatprep.subr.mxu0 0.0
      %1611 = vmatpush1.msra.mxu0 0.0
      %1612 = vmatprep.subr.mxu0 0.0
      %1613 = vmatpush1.msra.mxu0 0.0
      %1614 = vmatprep.subr.mxu0 0.0
      %1615 = vmatpush1.msra.mxu0 0.0
      %1616 = vmatprep.subr.mxu0 0.0
      %1617 = vmatpush1.msra.mxu0 0.0
      %1618 = vmatprep.subr.mxu0 0.0
      %1619 = vmatpush1.msra.mxu0 0.0
      %1620 = vmatprep.subr.mxu0 0.0
      %1621 = vmatpush1.msra.mxu0 0.0
      %1622 = vmatprep.subr.mxu0 0.0
      %1623 = vmatpush1.msra.mxu0 0.0
      %1624 = vmatprep.subr.mxu0 0.0
      %1625 = vmatpush1.msra.mxu0 0.0
      %1626 = vmatprep.subr.mxu0 0.0
      %1627 = vmatpush1.msra.mxu0 0.0
      %1628 = vmatprep.subr.mxu0 0.0
      %1629 = vmatpush1.msra.mxu0 0.0
      %1630 = vmatprep.subr.mxu0 0.0
      %1631 = vmatpush1.msra.mxu0 0.0
      %1632 = vmatprep.subr.mxu0 0.0
      %1633 = vmatpush1.msra.mxu0 0.0
      %1634 = vmatprep.subr.mxu0 0.0
      %1635 = vmatpush1.msra.mxu0 0.0
      %1636 = vmatprep.subr.mxu0 0.0
      %1637 = vmatpush1.msra.mxu0 0.0
      %1638 = vmatprep.subr.mxu0 0.0
      %1639 = vmatpush1.msra.mxu0 0.0
      %1640 = vmatprep.subr.mxu0 0.0
      %1641 = vmatpush1.msra.mxu0 0.0
      %1642 = vmatprep.mubr.f32.mxu0 0.0
      %1643 = vmatmul.mubr.f32.gmra.mrb[0].mxu0 %v1478
      %v1644 = vpop.f32.mrb[0].mxu0
      %v1645 = vadd.f32 0.0, %v1644
      %v1646 = vpop.f32.mrb[0].mxu0
      %1647 = vmatprep.mubr.f32.mxu0 0.0
      %1648 = vmatmul.mubr.f32.gmra.mrb[0].mxu0 %v1481
      %v1649 = vpop.f32.mrb[0].mxu0
      %v1650 = vadd.f32 0.0, %v1649
      %v1651 = vpop.f32.mrb[0].mxu0
      %1652 = vmatprep.mubr.f32.mxu0 0.0
      %1653 = vmatmul.mubr.f32.gmra.mrb[0].mxu0 %v1484
      %v1654 = vpop.f32.mrb[0].mxu0
      %v1655 = vadd.f32 0.0, %v1654
      %v1656 = vpop.f32.mrb[0].mxu0
      %1657 = vmatprep.mubr.f32.mxu0 0.0
      %1658 = vmatmul.mubr.f32.gmra.mrb[0].mxu0 %v1487
      %v1659 = vpop.f32.mrb[0].mxu0
      %v1660 = vadd.f32 0.0, %v1659
      %v1661 = vpop.f32.mrb[0].mxu0
      %1662 = vdwg.mxu0
      %v1663 = vadd.f32 %v1445, %v1556
      %v1664 = vadd.f32 %v1446, %v1558
      %v1665 = vadd.f32 %v1447, %v1645
      %v1666 = vadd.f32 %v1448, %v1562
      %v1667 = vadd.f32 %v1449, %v1564
      %v1668 = vadd.f32 %v1450, %v1650
      %v1669 = vadd.f32 %v1451, %v1568
      %v1670 = vadd.f32 %v1452, %v1570
      %v1671 = vadd.f32 %v1453, %v1655
      %v1672 = vadd.f32 %v1454, %v1574
      %v1673 = vadd.f32 %v1455, %v1576
      %v1674 = vadd.f32 %v1456, %v1660
      %s1675 = scalar_lea.vmem %s1, 224
      %v1676 = vld [vmem:[%s1675] sm:$0xff]
      %v1677 = vld [vmem:[%s1675 + $0x8] sm:$0xff]
      %v1678 = vld [vmem:[%s1675 + $0x10] sm:$0xff]
      %v1679 = vld [vmem:[%s1675 + $0x18] sm:$0xff]
      %1680 = vrot.lane.b32.xlu0 %v180, 79
      %v1681 = vpop.permute.xlu0 %1680
      %1682 = vrot.lane.b32.xlu0 %v181, 79
      %v1683 = vpop.permute.xlu0 %1682
      %1684 = vrot.lane.b32.xlu0 %v182, 79
      %v1685 = vpop.permute.xlu0 %1684
      %1686 = vrot.lane.b32.xlu0 %v183, 79
      %v1687 = vpop.permute.xlu0 %1686
      %vm1688 = vcmask 646144
      %v1689 = vsel %vm1688, %v1681, %v1683
      %v1690 = vsel %vm1688, %v1683, %v1685
      %v1691 = vsel %vm1688, %v1685, %v1687
      %v1696 = vsel %vm212, %v1676, 0
      %v1699 = vsel %vm212, %v1677, 0
      %v1702 = vsel %vm212, %v1678, 0
      %v1705 = vsel %vm212, %v1679, 0
      %1707 = vmatprep.subr.mxu0 %v1690
      %1708 = vmatpush1.msra.mxu0 %v1689
      %1709 = vmatprep.subr.mxu0 0.0
      %1710 = vmatpush1.msra.mxu0 0.0
      %1711 = vmatprep.subr.mxu0 0.0
      %1712 = vmatpush1.msra.mxu0 0.0
      %1713 = vmatprep.subr.mxu0 0.0
      %1714 = vmatpush1.msra.mxu0 0.0
      %1715 = vmatprep.subr.mxu0 0.0
      %1716 = vmatpush1.msra.mxu0 0.0
      %1717 = vmatprep.subr.mxu0 0.0
      %1718 = vmatpush1.msra.mxu0 0.0
      %1719 = vmatprep.subr.mxu0 0.0
      %1720 = vmatpush1.msra.mxu0 0.0
      %1721 = vmatprep.subr.mxu0 0.0
      %1722 = vmatpush1.msra.mxu0 0.0
      %1723 = vmatprep.subr.mxu0 0.0
      %1724 = vmatpush1.msra.mxu0 0.0
      %1725 = vmatprep.subr.mxu0 0.0
      %1726 = vmatpush1.msra.mxu0 0.0
      %1727 = vmatprep.subr.mxu0 0.0
      %1728 = vmatpush1.msra.mxu0 0.0
      %1729 = vmatprep.subr.mxu0 0.0
      %1730 = vmatpush1.msra.mxu0 0.0
      %1731 = vmatprep.subr.mxu0 0.0
      %1732 = vmatpush1.msra.mxu0 0.0
      %1733 = vmatprep.subr.mxu0 0.0
      %1734 = vmatpush1.msra.mxu0 0.0
      %1735 = vmatprep.subr.mxu0 0.0
      %1736 = vmatpush1.msra.mxu0 0.0
      %1737 = vmatprep.subr.mxu0 0.0
      %1738 = vmatpush1.msra.mxu0 0.0
      %1739 = vmatprep.subr.mxu0 0.0
      %1740 = vmatpush1.msra.mxu0 0.0
      %1741 = vmatprep.subr.mxu0 0.0
      %1742 = vmatpush1.msra.mxu0 0.0
      %1743 = vmatprep.subr.mxu0 0.0
      %1744 = vmatpush1.msra.mxu0 0.0
      %1745 = vmatprep.subr.mxu0 0.0
      %1746 = vmatpush1.msra.mxu0 0.0
      %1747 = vmatprep.subr.mxu0 0.0
      %1748 = vmatpush1.msra.mxu0 0.0
      %1749 = vmatprep.subr.mxu0 0.0
      %1750 = vmatpush1.msra.mxu0 0.0
      %1751 = vmatprep.subr.mxu0 0.0
      %1752 = vmatpush1.msra.mxu0 0.0
      %1753 = vmatprep.subr.mxu0 0.0
      %1754 = vmatpush1.msra.mxu0 0.0
      %1755 = vmatprep.subr.mxu0 0.0
      %1756 = vmatpush1.msra.mxu0 0.0
      %1757 = vmatprep.subr.mxu0 0.0
      %1758 = vmatpush1.msra.mxu0 0.0
      %1759 = vmatprep.subr.mxu0 0.0
      %1760 = vmatpush1.msra.mxu0 0.0
      %1761 = vmatprep.subr.mxu0 0.0
      %1762 = vmatpush1.msra.mxu0 0.0
      %1763 = vmatprep.subr.mxu0 0.0
      %1764 = vmatpush1.msra.mxu0 0.0
      %1765 = vmatprep.subr.mxu0 0.0
      %1766 = vmatpush1.msra.mxu0 0.0
      %1767 = vmatprep.subr.mxu0 0.0
      %1768 = vmatpush1.msra.mxu0 0.0
      %1769 = vmatprep.subr.mxu0 0.0
      %1770 = vmatpush1.msra.mxu0 0.0
      %1771 = vmatprep.mubr.f32.mxu0 0.0
      %1772 = vmatmul.mubr.f32.gmra.mrb[0].mxu0 %v1696
      %v1773 = vpop.f32.mrb[0].mxu0
      %v1774 = vadd.f32 0.0, %v1773
      %v1775 = vpop.f32.mrb[0].mxu0
      %v1776 = vadd.f32 0.0, %v1775
      %1777 = vmatprep.mubr.f32.mxu0 0.0
      %1778 = vmatmul.mubr.f32.gmra.mrb[0].mxu0 %v1699
      %v1779 = vpop.f32.mrb[0].mxu0
      %v1780 = vadd.f32 0.0, %v1779
      %v1781 = vpop.f32.mrb[0].mxu0
      %v1782 = vadd.f32 0.0, %v1781
      %1783 = vmatprep.mubr.f32.mxu0 0.0
      %1784 = vmatmul.mubr.f32.gmra.mrb[0].mxu0 %v1702
      %v1785 = vpop.f32.mrb[0].mxu0
      %v1786 = vadd.f32 0.0, %v1785
      %v1787 = vpop.f32.mrb[0].mxu0
      %v1788 = vadd.f32 0.0, %v1787
      %1789 = vmatprep.mubr.f32.mxu0 0.0
      %1790 = vmatmul.mubr.f32.gmra.mrb[0].mxu0 %v1705
      %v1791 = vpop.f32.mrb[0].mxu0
      %v1792 = vadd.f32 0.0, %v1791
      %v1793 = vpop.f32.mrb[0].mxu0
      %v1794 = vadd.f32 0.0, %v1793
      %1795 = vdwg.mxu0
      %1796 = vmatprep.subr.mxu0 0.0
      %1797 = vmatpush1.msra.mxu0 %v1691
      %1798 = vmatprep.subr.mxu0 0.0
      %1799 = vmatpush1.msra.mxu0 0.0
      %1800 = vmatprep.subr.mxu0 0.0
      %1801 = vmatpush1.msra.mxu0 0.0
      %1802 = vmatprep.subr.mxu0 0.0
      %1803 = vmatpush1.msra.mxu0 0.0
      %1804 = vmatprep.subr.mxu0 0.0
      %1805 = vmatpush1.msra.mxu0 0.0
      %1806 = vmatprep.subr.mxu0 0.0
      %1807 = vmatpush1.msra.mxu0 0.0
      %1808 = vmatprep.subr.mxu0 0.0
      %1809 = vmatpush1.msra.mxu0 0.0
      %1810 = vmatprep.subr.mxu0 0.0
      %1811 = vmatpush1.msra.mxu0 0.0
      %1812 = vmatprep.subr.mxu0 0.0
      %1813 = vmatpush1.msra.mxu0 0.0
      %1814 = vmatprep.subr.mxu0 0.0
      %1815 = vmatpush1.msra.mxu0 0.0
      %1816 = vmatprep.subr.mxu0 0.0
      %1817 = vmatpush1.msra.mxu0 0.0
      %1818 = vmatprep.subr.mxu0 0.0
      %1819 = vmatpush1.msra.mxu0 0.0
      %1820 = vmatprep.subr.mxu0 0.0
      %1821 = vmatpush1.msra.mxu0 0.0
      %1822 = vmatprep.subr.mxu0 0.0
      %1823 = vmatpush1.msra.mxu0 0.0
      %1824 = vmatprep.subr.mxu0 0.0
      %1825 = vmatpush1.msra.mxu0 0.0
      %1826 = vmatprep.subr.mxu0 0.0
      %1827 = vmatpush1.msra.mxu0 0.0
      %1828 = vmatprep.subr.mxu0 0.0
      %1829 = vmatpush1.msra.mxu0 0.0
      %1830 = vmatprep.subr.mxu0 0.0
      %1831 = vmatpush1.msra.mxu0 0.0
      %1832 = vmatprep.subr.mxu0 0.0
      %1833 = vmatpush1.msra.mxu0 0.0
      %1834 = vmatprep.subr.mxu0 0.0
      %1835 = vmatpush1.msra.mxu0 0.0
      %1836 = vmatprep.subr.mxu0 0.0
      %1837 = vmatpush1.msra.mxu0 0.0
      %1838 = vmatprep.subr.mxu0 0.0
      %1839 = vmatpush1.msra.mxu0 0.0
      %1840 = vmatprep.subr.mxu0 0.0
      %1841 = vmatpush1.msra.mxu0 0.0
      %1842 = vmatprep.subr.mxu0 0.0
      %1843 = vmatpush1.msra.mxu0 0.0
      %1844 = vmatprep.subr.mxu0 0.0
      %1845 = vmatpush1.msra.mxu0 0.0
      %1846 = vmatprep.subr.mxu0 0.0
      %1847 = vmatpush1.msra.mxu0 0.0
      %1848 = vmatprep.subr.mxu0 0.0
      %1849 = vmatpush1.msra.mxu0 0.0
      %1850 = vmatprep.subr.mxu0 0.0
      %1851 = vmatpush1.msra.mxu0 0.0
      %1852 = vmatprep.subr.mxu0 0.0
      %1853 = vmatpush1.msra.mxu0 0.0
      %1854 = vmatprep.subr.mxu0 0.0
      %1855 = vmatpush1.msra.mxu0 0.0
      %1856 = vmatprep.subr.mxu0 0.0
      %1857 = vmatpush1.msra.mxu0 0.0
      %1858 = vmatprep.subr.mxu0 0.0
      %1859 = vmatpush1.msra.mxu0 0.0
      %1860 = vmatprep.mubr.f32.mxu0 0.0
      %1861 = vmatmul.mubr.f32.gmra.mrb[0].mxu0 %v1696
      %v1862 = vpop.f32.mrb[0].mxu0
      %v1863 = vadd.f32 0.0, %v1862
      %v1864 = vpop.f32.mrb[0].mxu0
      %1865 = vmatprep.mubr.f32.mxu0 0.0
      %1866 = vmatmul.mubr.f32.gmra.mrb[0].mxu0 %v1699
      %v1867 = vpop.f32.mrb[0].mxu0
      %v1868 = vadd.f32 0.0, %v1867
      %v1869 = vpop.f32.mrb[0].mxu0
      %1870 = vmatprep.mubr.f32.mxu0 0.0
      %1871 = vmatmul.mubr.f32.gmra.mrb[0].mxu0 %v1702
      %v1872 = vpop.f32.mrb[0].mxu0
      %v1873 = vadd.f32 0.0, %v1872
      %v1874 = vpop.f32.mrb[0].mxu0
      %1875 = vmatprep.mubr.f32.mxu0 0.0
      %1876 = vmatmul.mubr.f32.gmra.mrb[0].mxu0 %v1705
      %v1877 = vpop.f32.mrb[0].mxu0
      %v1878 = vadd.f32 0.0, %v1877
      %v1879 = vpop.f32.mrb[0].mxu0
      %1880 = vdwg.mxu0
      %v1881 = vadd.f32 %v1663, %v1774
      %v1882 = vadd.f32 %v1664, %v1776
      %v1883 = vadd.f32 %v1665, %v1863
      %v1884 = vadd.f32 %v1666, %v1780
      %v1885 = vadd.f32 %v1667, %v1782
      %v1886 = vadd.f32 %v1668, %v1868
      %v1887 = vadd.f32 %v1669, %v1786
      %v1888 = vadd.f32 %v1670, %v1788
      %v1889 = vadd.f32 %v1671, %v1873
      %v1890 = vadd.f32 %v1672, %v1792
      %v1891 = vadd.f32 %v1673, %v1794
      %v1892 = vadd.f32 %v1674, %v1878
      %s1893 = scalar_lea.vmem %s1, 256
      %v1894 = vld [vmem:[%s1893] sm:$0xff]
      %v1895 = vld [vmem:[%s1893 + $0x8] sm:$0xff]
      %v1896 = vld [vmem:[%s1893 + $0x10] sm:$0xff]
      %v1897 = vld [vmem:[%s1893 + $0x18] sm:$0xff]
      %1898 = vrot.lane.b32.xlu0 %v180, 78
      %v1899 = vpop.permute.xlu0 %1898
      %1900 = vrot.lane.b32.xlu0 %v181, 78
      %v1901 = vpop.permute.xlu0 %1900
      %1902 = vrot.lane.b32.xlu0 %v182, 78
      %v1903 = vpop.permute.xlu0 %1902
      %1904 = vrot.lane.b32.xlu0 %v183, 78
      %v1905 = vpop.permute.xlu0 %1904
      %vm1906 = vcmask 637952
      %v1907 = vsel %vm1906, %v1899, %v1901
      %v1908 = vsel %vm1906, %v1901, %v1903
      %v1909 = vsel %vm1906, %v1903, %v1905
      %v1914 = vsel %vm212, %v1894, 0
      %v1917 = vsel %vm212, %v1895, 0
      %v1920 = vsel %vm212, %v1896, 0
      %v1923 = vsel %vm212, %v1897, 0
      %1925 = vmatprep.subr.mxu0 %v1908
      %1926 = vmatpush1.msra.mxu0 %v1907
      %1927 = vmatprep.subr.mxu0 0.0
      %1928 = vmatpush1.msra.mxu0 0.0
      %1929 = vmatprep.subr.mxu0 0.0
      %1930 = vmatpush1.msra.mxu0 0.0
      %1931 = vmatprep.subr.mxu0 0.0
      %1932 = vmatpush1.msra.mxu0 0.0
      %1933 = vmatprep.subr.mxu0 0.0
      %1934 = vmatpush1.msra.mxu0 0.0
      %1935 = vmatprep.subr.mxu0 0.0
      %1936 = vmatpush1.msra.mxu0 0.0
      %1937 = vmatprep.subr.mxu0 0.0
      %1938 = vmatpush1.msra.mxu0 0.0
      %1939 = vmatprep.subr.mxu0 0.0
      %1940 = vmatpush1.msra.mxu0 0.0
      %1941 = vmatprep.subr.mxu0 0.0
      %1942 = vmatpush1.msra.mxu0 0.0
      %1943 = vmatprep.subr.mxu0 0.0
      %1944 = vmatpush1.msra.mxu0 0.0
      %1945 = vmatprep.subr.mxu0 0.0
      %1946 = vmatpush1.msra.mxu0 0.0
      %1947 = vmatprep.subr.mxu0 0.0
      %1948 = vmatpush1.msra.mxu0 0.0
      %1949 = vmatprep.subr.mxu0 0.0
      %1950 = vmatpush1.msra.mxu0 0.0
      %1951 = vmatprep.subr.mxu0 0.0
      %1952 = vmatpush1.msra.mxu0 0.0
      %1953 = vmatprep.subr.mxu0 0.0
      %1954 = vmatpush1.msra.mxu0 0.0
      %1955 = vmatprep.subr.mxu0 0.0
      %1956 = vmatpush1.msra.mxu0 0.0
      %1957 = vmatprep.subr.mxu0 0.0
      %1958 = vmatpush1.msra.mxu0 0.0
      %1959 = vmatprep.subr.mxu0 0.0
      %1960 = vmatpush1.msra.mxu0 0.0
      %1961 = vmatprep.subr.mxu0 0.0
      %1962 = vmatpush1.msra.mxu0 0.0
      %1963 = vmatprep.subr.mxu0 0.0
      %1964 = vmatpush1.msra.mxu0 0.0
      %1965 = vmatprep.subr.mxu0 0.0
      %1966 = vmatpush1.msra.mxu0 0.0
      %1967 = vmatprep.subr.mxu0 0.0
      %1968 = vmatpush1.msra.mxu0 0.0
      %1969 = vmatprep.subr.mxu0 0.0
      %1970 = vmatpush1.msra.mxu0 0.0
      %1971 = vmatprep.subr.mxu0 0.0
      %1972 = vmatpush1.msra.mxu0 0.0
      %1973 = vmatprep.subr.mxu0 0.0
      %1974 = vmatpush1.msra.mxu0 0.0
      %1975 = vmatprep.subr.mxu0 0.0
      %1976 = vmatpush1.msra.mxu0 0.0
      %1977 = vmatprep.subr.mxu0 0.0
      %1978 = vmatpush1.msra.mxu0 0.0
      %1979 = vmatprep.subr.mxu0 0.0
      %1980 = vmatpush1.msra.mxu0 0.0
      %1981 = vmatprep.subr.mxu0 0.0
      %1982 = vmatpush1.msra.mxu0 0.0
      %1983 = vmatprep.subr.mxu0 0.0
      %1984 = vmatpush1.msra.mxu0 0.0
      %1985 = vmatprep.subr.mxu0 0.0
      %1986 = vmatpush1.msra.mxu0 0.0
      %1987 = vmatprep.subr.mxu0 0.0
      %1988 = vmatpush1.msra.mxu0 0.0
      %1989 = vmatprep.mubr.f32.mxu0 0.0
      %1990 = vmatmul.mubr.f32.gmra.mrb[0].mxu0 %v1914
      %v1991 = vpop.f32.mrb[0].mxu0
      %v1992 = vadd.f32 0.0, %v1991
      %v1993 = vpop.f32.mrb[0].mxu0
      %v1994 = vadd.f32 0.0, %v1993
      %1995 = vmatprep.mubr.f32.mxu0 0.0
      %1996 = vmatmul.mubr.f32.gmra.mrb[0].mxu0 %v1917
      %v1997 = vpop.f32.mrb[0].mxu0
      %v1998 = vadd.f32 0.0, %v1997
      %v1999 = vpop.f32.mrb[0].mxu0
      %v2000 = vadd.f32 0.0, %v1999
      %2001 = vmatprep.mubr.f32.mxu0 0.0
      %2002 = vmatmul.mubr.f32.gmra.mrb[0].mxu0 %v1920
      %v2003 = vpop.f32.mrb[0].mxu0
      %v2004 = vadd.f32 0.0, %v2003
      %v2005 = vpop.f32.mrb[0].mxu0
      %v2006 = vadd.f32 0.0, %v2005
      %2007 = vmatprep.mubr.f32.mxu0 0.0
      %2008 = vmatmul.mubr.f32.gmra.mrb[0].mxu0 %v1923
      %v2009 = vpop.f32.mrb[0].mxu0
      %v2010 = vadd.f32 0.0, %v2009
      %v2011 = vpop.f32.mrb[0].mxu0
      %v2012 = vadd.f32 0.0, %v2011
      %2013 = vdwg.mxu0
      %2014 = vmatprep.subr.mxu0 0.0
      %2015 = vmatpush1.msra.mxu0 %v1909
      %2016 = vmatprep.subr.mxu0 0.0
      %2017 = vmatpush1.msra.mxu0 0.0
      %2018 = vmatprep.subr.mxu0 0.0
      %2019 = vmatpush1.msra.mxu0 0.0
      %2020 = vmatprep.subr.mxu0 0.0
      %2021 = vmatpush1.msra.mxu0 0.0
      %2022 = vmatprep.subr.mxu0 0.0
      %2023 = vmatpush1.msra.mxu0 0.0
      %2024 = vmatprep.subr.mxu0 0.0
      %2025 = vmatpush1.msra.mxu0 0.0
      %2026 = vmatprep.subr.mxu0 0.0
      %2027 = vmatpush1.msra.mxu0 0.0
      %2028 = vmatprep.subr.mxu0 0.0
      %2029 = vmatpush1.msra.mxu0 0.0
      %2030 = vmatprep.subr.mxu0 0.0
      %2031 = vmatpush1.msra.mxu0 0.0
      %2032 = vmatprep.subr.mxu0 0.0
      %2033 = vmatpush1.msra.mxu0 0.0
      %2034 = vmatprep.subr.mxu0 0.0
      %2035 = vmatpush1.msra.mxu0 0.0
      %2036 = vmatprep.subr.mxu0 0.0
      %2037 = vmatpush1.msra.mxu0 0.0
      %2038 = vmatprep.subr.mxu0 0.0
      %2039 = vmatpush1.msra.mxu0 0.0
      %2040 = vmatprep.subr.mxu0 0.0
      %2041 = vmatpush1.msra.mxu0 0.0
      %2042 = vmatprep.subr.mxu0 0.0
      %2043 = vmatpush1.msra.mxu0 0.0
      %2044 = vmatprep.subr.mxu0 0.0
      %2045 = vmatpush1.msra.mxu0 0.0
      %2046 = vmatprep.subr.mxu0 0.0
      %2047 = vmatpush1.msra.mxu0 0.0
      %2048 = vmatprep.subr.mxu0 0.0
      %2049 = vmatpush1.msra.mxu0 0.0
      %2050 = vmatprep.subr.mxu0 0.0
      %2051 = vmatpush1.msra.mxu0 0.0
      %2052 = vmatprep.subr.mxu0 0.0
      %2053 = vmatpush1.msra.mxu0 0.0
      %2054 = vmatprep.subr.mxu0 0.0
      %2055 = vmatpush1.msra.mxu0 0.0
      %2056 = vmatprep.subr.mxu0 0.0
      %2057 = vmatpush1.msra.mxu0 0.0
      %2058 = vmatprep.subr.mxu0 0.0
      %2059 = vmatpush1.msra.mxu0 0.0
      %2060 = vmatprep.subr.mxu0 0.0
      %2061 = vmatpush1.msra.mxu0 0.0
      %2062 = vmatprep.subr.mxu0 0.0
      %2063 = vmatpush1.msra.mxu0 0.0
      %2064 = vmatprep.subr.mxu0 0.0
      %2065 = vmatpush1.msra.mxu0 0.0
      %2066 = vmatprep.subr.mxu0 0.0
      %2067 = vmatpush1.msra.mxu0 0.0
      %2068 = vmatprep.subr.mxu0 0.0
      %2069 = vmatpush1.msra.mxu0 0.0
      %2070 = vmatprep.subr.mxu0 0.0
      %2071 = vmatpush1.msra.mxu0 0.0
      %2072 = vmatprep.subr.mxu0 0.0
      %2073 = vmatpush1.msra.mxu0 0.0
      %2074 = vmatprep.subr.mxu0 0.0
      %2075 = vmatpush1.msra.mxu0 0.0
      %2076 = vmatprep.subr.mxu0 0.0
      %2077 = vmatpush1.msra.mxu0 0.0
      %2078 = vmatprep.mubr.f32.mxu0 0.0
      %2079 = vmatmul.mubr.f32.gmra.mrb[0].mxu0 %v1914
      %v2080 = vpop.f32.mrb[0].mxu0
      %v2081 = vadd.f32 0.0, %v2080
      %v2082 = vpop.f32.mrb[0].mxu0
      %2083 = vmatprep.mubr.f32.mxu0 0.0
      %2084 = vmatmul.mubr.f32.gmra.mrb[0].mxu0 %v1917
      %v2085 = vpop.f32.mrb[0].mxu0
      %v2086 = vadd.f32 0.0, %v2085
      %v2087 = vpop.f32.mrb[0].mxu0
      %2088 = vmatprep.mubr.f32.mxu0 0.0
      %2089 = vmatmul.mubr.f32.gmra.mrb[0].mxu0 %v1920
      %v2090 = vpop.f32.mrb[0].mxu0
      %v2091 = vadd.f32 0.0, %v2090
      %v2092 = vpop.f32.mrb[0].mxu0
      %2093 = vmatprep.mubr.f32.mxu0 0.0
      %2094 = vmatmul.mubr.f32.gmra.mrb[0].mxu0 %v1923
      %v2095 = vpop.f32.mrb[0].mxu0
      %v2096 = vadd.f32 0.0, %v2095
      %v2097 = vpop.f32.mrb[0].mxu0
      %2098 = vdwg.mxu0
      %v2099 = vadd.f32 %v1881, %v1992
      %v2100 = vadd.f32 %v1882, %v1994
      %v2101 = vadd.f32 %v1883, %v2081
      %v2102 = vadd.f32 %v1884, %v1998
      %v2103 = vadd.f32 %v1885, %v2000
      %v2104 = vadd.f32 %v1886, %v2086
      %v2105 = vadd.f32 %v1887, %v2004
      %v2106 = vadd.f32 %v1888, %v2006
      %v2107 = vadd.f32 %v1889, %v2091
      %v2108 = vadd.f32 %v1890, %v2010
      %v2109 = vadd.f32 %v1891, %v2012
      %v2110 = vadd.f32 %v1892, %v2096
      %2111 = vst [vmem:[%s179] sm:$0xff] %v2099
      %2112 = vst [vmem:[%s179 + $0x8] sm:$0xff] %v2100
      %2113 = vst [vmem:[%s179 + $0x10] sm:$0xff] %v2101
      %2114 = vst [vmem:[%s179 + $0x18] sm:$0xff] %v2102
      %2115 = vst [vmem:[%s179 + $0x20] sm:$0xff] %v2103
      %2116 = vst [vmem:[%s179 + $0x28] sm:$0xff] %v2104
      %2117 = vst [vmem:[%s179 + $0x30] sm:$0xff] %v2105
      %2118 = vst [vmem:[%s179 + $0x38] sm:$0xff] %v2106
      %2119 = vst [vmem:[%s179 + $0x40] sm:$0xff] %v2107
      %2120 = vst [vmem:[%s179 + $0x48] sm:$0xff] %v2108
      %2121 = vst [vmem:[%s179 + $0x50] sm:$0xff] %v2109
      %2122 = vst [vmem:[%s179 + $0x58] sm:$0xff] %v2110
      %p2123 = scmp.lt.s32.totalorder %s17, 1
      %s2124 = scalar_select %p2123, %s17, 1
      %p2125 = scmp.lt.s32.totalorder %s18, 0
      %s2126 = scalar_select %p2125, %s18, 0
      %s2127 = smul.addr %s2126, 12
      %s2128 = smul.addr %s2124, 12
      %s2129 = sadd.s32 %s2127, %s2128
      %s2130 = smul.addr %s2129, 8
      %s2131 = scalar_lea.vmem %s2, %s2130
      // Predicated region
      $region29: #{_lambda_.1} parent=27 // pred_check
        %p2132 = pneg %p94
      $region30: #{_lambda_.1} parent=27 // pred_check_branch
        %2134 = sbr.rel (%p2132) target = $region32
      $region31: #{_lambda_.1} parent=27 // pred_region
        _
      $region32: #{_lambda_.1} parent=27 // pred_fallthru
        _
    $region28: #{_lambda_.1} parent=5 // pred_fallthru
      _
    %p2135 = scmp.le.s32.totalorder 2, %s8
    // Predicated region
    $region33: #{_lambda_.1} parent=5 // pred_check
      %p2136 = pneg %p2135
    $region34: #{_lambda_.1} parent=5 // pred_check_branch
      %2138 = sbr.rel (%p2136) target = $region36
    $region35: #{_lambda_.1} parent=5 // pred_region
      %s2139 = ssub.s32 %s8, 2
      // Predicated region
      $region37: #{_lambda_.1} parent=35 // pred_check
        %p2140 = pneg %p100
      $region38: #{_lambda_.1} parent=35 // pred_check_branch
        %2142 = sbr.rel (%p2140) target = $region40
      $region39: #{_lambda_.1} parent=35 // pred_region
        %p2143 = scmp.lt.s32.totalorder %s19, 1
        %s2144 = scalar_select %p2143, %s19, 1
        %p2145 = scmp.lt.s32.totalorder %s20, 0
        %s2146 = scalar_select %p2145, %s20, 0
        %s2147 = smul.addr %s2146, 12
        %s2148 = smul.addr %s2144, 12
        %s2149 = sadd.s32 %s2147, %s2148
        %s2150 = smul.addr %s2149, 8
        %s2151 = scalar_lea.vmem %s2, %s2150
      $region40: #{_lambda_.1} parent=35 // pred_fallthru
        _
    $region36: #{_lambda_.1} parent=5 // pred_fallthru
      _
  $region6: #{_lambda_.1} parent=0 // loop_footer
    %s12 = sadd.s32 1, %s8
  $region7: #{_lambda_.1} parent=0 // loop_footer_branch
    %7 = sbr.rel target = $region3
  $region8: #{_lambda_.1} parent=0 // loop_exit
    _

</llo_original>
